<compile_context>
chip_gen: v7x
topology: tpu7x:2x2x1
jax: 0.10.0
libtpu: 0.0.40
codegen_flags: <defaults>
</compile_context>

<pallas_src>
import functools

import jax
import jax.numpy as jnp
from jax.experimental import pallas as pl
from jax.experimental.pallas import tpu as pltpu


def _pick_bt(B: int, N: int) -> int:
    """Batch rows per grid step: fill sublanes, stay inside the vreg file."""
    if N <= 256:
        bt = 32
    elif N <= 1024:
        bt = 16
    else:
        bt = 8
    b_ceil = ((B + 7) // 8) * 8          # keep BT a multiple of 8 (sublanes)
    return min(bt, b_ceil)


def _fps_kernel(x_ref, y_ref):
    """FPS + gather for BT batch elements.

    x_ref : (3, BT, N) VMEM block — channel-major points, dense (BT, N) slabs
    y_ref : (3, BT, K) VMEM block — sampled points (channel-major)
    """
    BT = x_ref.shape[1]
    N = x_ref.shape[2]
    K = y_ref.shape[2]

    # Hoist the point coordinates into (BT, N) f32 slabs (compute in f32 even
    # for lower-precision inputs).  For very large N this would pressure the
    # 64-vreg file — see the chunked-dist TODO at the top of the file.
    x0 = x_ref[0].astype(jnp.float32)
    x1 = x_ref[1].astype(jnp.float32)
    x2 = x_ref[2].astype(jnp.float32)

    lane_iota = jax.lax.broadcasted_iota(jnp.int32, (BT, N), 1)  # point index
    col_iota = jax.lax.broadcasted_iota(jnp.int32, (1, K), 1)    # output slot

    # ---- peeled iteration k = 0: start point is index 0 (permute=False) ----
    c0 = x0[:, 0:1]                                   # (BT, 1) static slice
    c1 = x1[:, 0:1]
    c2 = x2[:, 0:1]
    sel0 = col_iota == 0                              # (1, K) bool
    acc0 = jnp.where(sel0, c0, 0.0)                   # (BT, K) accumulators
    acc1 = jnp.where(sel0, c1, 0.0)
    acc2 = jnp.where(sel0, c2, 0.0)
    d = (x0 - c0) ** 2 + (x1 - c1) ** 2 + (x2 - c2) ** 2
    dist = jnp.minimum(d, jnp.float32(1e10))          # running min distance
    maxv = jnp.max(dist, axis=1, keepdims=True)       # (BT, 1)
    cand = jnp.where(dist == maxv, lane_iota, N)
    farthest = jnp.min(cand, axis=1, keepdims=True)   # first-occurrence argmax

    # ---- iterations k = 1 .. K-1 (carry lives entirely in vregs) ----
    def body(k, carry):
        dist, farthest, acc0, acc1, acc2 = carry
        # one-hot of the selected point along the lane (point) axis
        sel = (lane_iota == farthest).astype(jnp.float32)        # (BT, N)
        # coordinates of the selected point: masked lane-reduce per channel
        c0 = jnp.sum(x0 * sel, axis=1, keepdims=True)            # (BT, 1)
        c1 = jnp.sum(x1 * sel, axis=1, keepdims=True)
        c2 = jnp.sum(x2 * sel, axis=1, keepdims=True)
        # place the selected point into output column k (single VPU select)
        here = col_iota == k                                     # (1, K)
        acc0 = jnp.where(here, c0, acc0)
        acc1 = jnp.where(here, c1, acc1)
        acc2 = jnp.where(here, c2, acc2)
        # squared distance of every point to the new centroid
        d = (x0 - c0) ** 2 + (x1 - c1) ** 2 + (x2 - c2) ** 2
        dist = jnp.minimum(dist, d)
        # exact first-occurrence argmax per batch row
        maxv = jnp.max(dist, axis=1, keepdims=True)
        cand = jnp.where(dist == maxv, lane_iota, N)
        farthest = jnp.min(cand, axis=1, keepdims=True)
        return dist, farthest, acc0, acc1, acc2

    # Full unroll only while code size / live ranges stay modest at this BT.
    unroll = True if K * (BT // 8) <= 64 else 8
    _, _, acc0, acc1, acc2 = jax.lax.fori_loop(
        1, K, body, (dist, farthest, acc0, acc1, acc2), unroll=unroll)

    y_ref[0] = acc0.astype(y_ref.dtype)
    y_ref[1] = acc1.astype(y_ref.dtype)
    y_ref[2] = acc2.astype(y_ref.dtype)


def fps_sampler_forward(x_bnc: jax.Array, num_out_points: int) -> jax.Array:
    """FPSSampler.forward for input_shape='bnc', output_shape='bnc', permute=False.

    x_bnc: (B, N, 3) -> (B, K, 3) farthest-point-sampled points.
    """
    B, N, C = x_bnc.shape
    assert C == 3, "FPS expects 3-D point coordinates"
    K = num_out_points
    BT = _pick_bt(B, N)

    # Channel-major layout so every in-kernel array is a dense (BT, N) slab.
    # (Kept host-side: relayouting a minor-dim-3 'bnc' block inside the kernel
    #  lowers poorly on Mosaic; this one transpose buys dense vregs for the
    #  entire serial K-loop.)
    x_cbn = jnp.transpose(x_bnc, (2, 0, 1))            # (3, B, N)

    itemsize = jnp.dtype(x_bnc.dtype).itemsize
    cost = pl.CostEstimate(
        flops=10 * B * K * N,
        transcendentals=0,
        bytes_accessed=3 * B * N * itemsize + 3 * B * K * itemsize,
    )

    # No host-side batch pad: the final partial block reads/writes
    # out-of-range rows; those rows never mix with valid rows and the
    # out-of-range output stores are masked.
    y_cbk = pl.pallas_call(
        _fps_kernel,
        out_shape=jax.ShapeDtypeStruct((3, B, K), x_bnc.dtype),
        grid=(pl.cdiv(B, BT),),
        in_specs=[pl.BlockSpec((3, BT, N), lambda i: (0, i, 0))],
        out_specs=pl.BlockSpec((3, BT, K), lambda i: (0, i, 0)),
        compiler_params=pltpu.CompilerParams(
            dimension_semantics=("parallel",)),
        cost_estimate=cost,
    )(x_cbn)

    # Output is tiny (B*K*3); the closing transpose is negligible.
    return jnp.transpose(y_cbk, (1, 2, 0))              # (B, K, 3)


def _fps_reference(x_bnc: jax.Array, num_out_points: int) -> jax.Array:
    """Pure-JAX reference of the same FPS + gather semantics."""
    B, N, _ = x_bnc.shape
    K = num_out_points

    def one(pts):  # pts: (N, 3)
        def body(k, carry):
            dist, farthest, idx = carry
            idx = idx.at[k].set(farthest)
            centroid = pts[farthest]
            d = jnp.sum((pts - centroid) ** 2, axis=-1)
            dist = jnp.minimum(dist, d)
            farthest = jnp.argmax(dist).astype(jnp.int32)
            return dist, farthest, idx

        dist0 = jnp.full((N,), 1e10, jnp.float32)
        idx0 = jnp.zeros((K,), jnp.int32)
        _, _, idx = jax.lax.fori_loop(0, K, body, (dist0, jnp.int32(0), idx0))
        return pts[idx]                                 # (K, 3)

    return jax.vmap(one)(x_bnc)


if __name__ == "__main__":
    key = jax.random.PRNGKey(0)

    # Main check: small shapes consistent with the module.
    B, N, K = 2, 128, 16
    x = jax.random.normal(key, (B, N, 3), dtype=jnp.float32)
    fwd = jax.jit(functools.partial(fps_sampler_forward, num_out_points=K))
    y = jax.block_until_ready(fwd(x))
    y_ref = _fps_reference(x, K)
    assert y.shape == (B, K, 3), y.shape
    assert jnp.allclose(y, y_ref, atol=1e-5, rtol=1e-5), "mismatch vs reference"

    # Secondary check: batch not a multiple of the tile (exercises the
    # partial last block that replaced the host-side pad).
    B2, N2, K2 = 3, 96, 12
    x2 = jax.random.normal(jax.random.PRNGKey(1), (B2, N2, 3), dtype=jnp.float32)
    fwd2 = jax.jit(functools.partial(fps_sampler_forward, num_out_points=K2))
    y2 = jax.block_until_ready(fwd2(x2))
    y2_ref = _fps_reference(x2, K2)
    assert y2.shape == (B2, K2, 3), y2.shape
    assert jnp.allclose(y2, y2_ref, atol=1e-5, rtol=1e-5), "mismatch vs reference (partial block)"

    print("KERNEL_OK")
</pallas_src>

<mosaic_0001>
module attributes {stable_mosaic.version = 11 : i64} {
  func.func @_fps_kernel(%arg0: i32, %arg1: memref<3x8x128xf32, #tpu.memory_space<vmem>>, %arg2: memref<3x8x16xf32, #tpu.memory_space<vmem>>) attributes {dimension_semantics = [#tpu.dimension_semantics<parallel>], iteration_bounds = array<i64: 1>, scalar_prefetch = 0 : i64, scratch_operands = 0 : i64, tpu.core_type = #tpu.core_type<tc>, window_params = [{transform_indices = @transform_0, window_bounds = array<i64: 3, 8, 128>}, {transform_indices = @transform_1, window_bounds = array<i64: 3, 8, 16>}]} {
    %c0 = arith.constant 0 : index
    %c0_0 = arith.constant 0 : index
    %c0_1 = arith.constant 0 : index
    %0 = vector.load %arg1[%c0, %c0_0, %c0_1] : memref<3x8x128xf32, #tpu.memory_space<vmem>>, vector<1x8x128xf32>
    %1 = vector.shape_cast %0 : vector<1x8x128xf32> to vector<8x128xf32>
    %c1 = arith.constant 1 : index
    %c0_2 = arith.constant 0 : index
    %c0_3 = arith.constant 0 : index
    %2 = vector.load %arg1[%c1, %c0_2, %c0_3] : memref<3x8x128xf32, #tpu.memory_space<vmem>>, vector<1x8x128xf32>
    %3 = vector.shape_cast %2 : vector<1x8x128xf32> to vector<8x128xf32>
    %c2 = arith.constant 2 : index
    %c0_4 = arith.constant 0 : index
    %c0_5 = arith.constant 0 : index
    %4 = vector.load %arg1[%c2, %c0_4, %c0_5] : memref<3x8x128xf32, #tpu.memory_space<vmem>>, vector<1x8x128xf32>
    %5 = vector.shape_cast %4 : vector<1x8x128xf32> to vector<8x128xf32>
    %6 = tpu.iota {dimensions = array<i32: 1>} : vector<8x128xi32>
    %7 = tpu.iota {dimensions = array<i32: 1>} : vector<1x16xi32>
    %8 = vector.extract_strided_slice %1 {offsets = [0, 0], sizes = [8, 1], strides = [1, 1]} : vector<8x128xf32> to vector<8x1xf32>
    %9 = vector.extract_strided_slice %3 {offsets = [0, 0], sizes = [8, 1], strides = [1, 1]} : vector<8x128xf32> to vector<8x1xf32>
    %10 = vector.extract_strided_slice %5 {offsets = [0, 0], sizes = [8, 1], strides = [1, 1]} : vector<8x128xf32> to vector<8x1xf32>
    %c0_i32 = arith.constant 0 : i32
    %11 = vector.broadcast %c0_i32 : i32 to vector<1x16xi32>
    %12 = arith.cmpi eq, %7, %11 : vector<1x16xi32>
    %cst = arith.constant 0.000000e+00 : f32
    %13 = vector.shape_cast %12 : vector<1x16xi1> to vector<1x16xi1>
    %14 = vector.broadcast %13 : vector<1x16xi1> to vector<8x16xi1>
    %15 = vector.shape_cast %8 : vector<8x1xf32> to vector<8x1xf32>
    %16 = vector.broadcast %15 : vector<8x1xf32> to vector<8x16xf32>
    %17 = vector.broadcast %cst : f32 to vector<8x16xf32>
    %18 = arith.select %14, %16, %17 : vector<8x16xi1>, vector<8x16xf32>
    %cst_6 = arith.constant 0.000000e+00 : f32
    %19 = vector.shape_cast %12 : vector<1x16xi1> to vector<1x16xi1>
    %20 = vector.broadcast %19 : vector<1x16xi1> to vector<8x16xi1>
    %21 = vector.shape_cast %9 : vector<8x1xf32> to vector<8x1xf32>
    %22 = vector.broadcast %21 : vector<8x1xf32> to vector<8x16xf32>
    %23 = vector.broadcast %cst_6 : f32 to vector<8x16xf32>
    %24 = arith.select %20, %22, %23 : vector<8x16xi1>, vector<8x16xf32>
    %cst_7 = arith.constant 0.000000e+00 : f32
    %25 = vector.shape_cast %12 : vector<1x16xi1> to vector<1x16xi1>
    %26 = vector.broadcast %25 : vector<1x16xi1> to vector<8x16xi1>
    %27 = vector.shape_cast %10 : vector<8x1xf32> to vector<8x1xf32>
    %28 = vector.broadcast %27 : vector<8x1xf32> to vector<8x16xf32>
    %29 = vector.broadcast %cst_7 : f32 to vector<8x16xf32>
    %30 = arith.select %26, %28, %29 : vector<8x16xi1>, vector<8x16xf32>
    %31 = vector.broadcast %8 : vector<8x1xf32> to vector<8x128xf32>
    %32 = arith.subf %1, %31 : vector<8x128xf32>
    %33 = arith.mulf %32, %32 : vector<8x128xf32>
    %34 = vector.broadcast %9 : vector<8x1xf32> to vector<8x128xf32>
    %35 = arith.subf %3, %34 : vector<8x128xf32>
    %36 = arith.mulf %35, %35 : vector<8x128xf32>
    %37 = arith.addf %33, %36 : vector<8x128xf32>
    %38 = vector.broadcast %10 : vector<8x1xf32> to vector<8x128xf32>
    %39 = arith.subf %5, %38 : vector<8x128xf32>
    %40 = arith.mulf %39, %39 : vector<8x128xf32>
    %41 = arith.addf %37, %40 : vector<8x128xf32>
    %cst_8 = arith.constant 1.000000e+10 : f32
    %42 = vector.broadcast %cst_8 : f32 to vector<8x128xf32>
    %43 = arith.minimumf %41, %42 : vector<8x128xf32>
    %cst_9 = arith.constant dense<0xFF800000> : vector<8xf32>
    %44 = vector.multi_reduction <maximumf>, %43, %cst_9 [1] : vector<8x128xf32> to vector<8xf32>
    %45 = vector.shape_cast %44 : vector<8xf32> to vector<8x1xf32>
    %46 = vector.broadcast %45 : vector<8x1xf32> to vector<8x128xf32>
    %47 = arith.cmpf oeq, %43, %46 : vector<8x128xf32>
    %c128_i32 = arith.constant 128 : i32
    %48 = vector.broadcast %c128_i32 : i32 to vector<8x128xi32>
    %49 = arith.select %47, %6, %48 : vector<8x128xi1>, vector<8x128xi32>
    %cst_10 = arith.constant dense<2147483647> : vector<8xi32>
    %50 = vector.multi_reduction <minsi>, %49, %cst_10 [1] : vector<8x128xi32> to vector<8xi32>
    %51 = vector.shape_cast %50 : vector<8xi32> to vector<8x1xi32>
    %c1_i32 = arith.constant 1 : i32
    %52 = vector.broadcast %51 : vector<8x1xi32> to vector<8x128xi32>
    %53 = arith.cmpi eq, %6, %52 : vector<8x128xi32>
    %54 = arith.extui %53 : vector<8x128xi1> to vector<8x128xi32>
    %55 = arith.sitofp %54 : vector<8x128xi32> to vector<8x128xf32>
    %56 = arith.mulf %1, %55 : vector<8x128xf32>
    %cst_11 = arith.constant dense<0.000000e+00> : vector<8xf32>
    %57 = vector.multi_reduction <add>, %56, %cst_11 [1] : vector<8x128xf32> to vector<8xf32>
    %58 = vector.shape_cast %57 : vector<8xf32> to vector<8x1xf32>
    %59 = arith.mulf %3, %55 : vector<8x128xf32>
    %cst_12 = arith.constant dense<0.000000e+00> : vector<8xf32>
    %60 = vector.multi_reduction <add>, %59, %cst_12 [1] : vector<8x128xf32> to vector<8xf32>
    %61 = vector.shape_cast %60 : vector<8xf32> to vector<8x1xf32>
    %62 = arith.mulf %5, %55 : vector<8x128xf32>
    %cst_13 = arith.constant dense<0.000000e+00> : vector<8xf32>
    %63 = vector.multi_reduction <add>, %62, %cst_13 [1] : vector<8x128xf32> to vector<8xf32>
    %64 = vector.shape_cast %63 : vector<8xf32> to vector<8x1xf32>
    %65 = vector.broadcast %c1_i32 : i32 to vector<1x16xi32>
    %66 = arith.cmpi eq, %7, %65 : vector<1x16xi32>
    %67 = vector.shape_cast %66 : vector<1x16xi1> to vector<1x16xi1>
    %68 = vector.broadcast %67 : vector<1x16xi1> to vector<8x16xi1>
    %69 = vector.shape_cast %58 : vector<8x1xf32> to vector<8x1xf32>
    %70 = vector.broadcast %69 : vector<8x1xf32> to vector<8x16xf32>
    %71 = arith.select %68, %70, %18 : vector<8x16xi1>, vector<8x16xf32>
    %72 = vector.shape_cast %66 : vector<1x16xi1> to vector<1x16xi1>
    %73 = vector.broadcast %72 : vector<1x16xi1> to vector<8x16xi1>
    %74 = vector.shape_cast %61 : vector<8x1xf32> to vector<8x1xf32>
    %75 = vector.broadcast %74 : vector<8x1xf32> to vector<8x16xf32>
    %76 = arith.select %73, %75, %24 : vector<8x16xi1>, vector<8x16xf32>
    %77 = vector.shape_cast %66 : vector<1x16xi1> to vector<1x16xi1>
    %78 = vector.broadcast %77 : vector<1x16xi1> to vector<8x16xi1>
    %79 = vector.shape_cast %64 : vector<8x1xf32> to vector<8x1xf32>
    %80 = vector.broadcast %79 : vector<8x1xf32> to vector<8x16xf32>
    %81 = arith.select %78, %80, %30 : vector<8x16xi1>, vector<8x16xf32>
    %82 = vector.broadcast %58 : vector<8x1xf32> to vector<8x128xf32>
    %83 = arith.subf %1, %82 : vector<8x128xf32>
    %84 = arith.mulf %83, %83 : vector<8x128xf32>
    %85 = vector.broadcast %61 : vector<8x1xf32> to vector<8x128xf32>
    %86 = arith.subf %3, %85 : vector<8x128xf32>
    %87 = arith.mulf %86, %86 : vector<8x128xf32>
    %88 = arith.addf %84, %87 : vector<8x128xf32>
    %89 = vector.broadcast %64 : vector<8x1xf32> to vector<8x128xf32>
    %90 = arith.subf %5, %89 : vector<8x128xf32>
    %91 = arith.mulf %90, %90 : vector<8x128xf32>
    %92 = arith.addf %88, %91 : vector<8x128xf32>
    %93 = arith.minimumf %43, %92 : vector<8x128xf32>
    %cst_14 = arith.constant dense<0xFF800000> : vector<8xf32>
    %94 = vector.multi_reduction <maximumf>, %93, %cst_14 [1] : vector<8x128xf32> to vector<8xf32>
    %95 = vector.shape_cast %94 : vector<8xf32> to vector<8x1xf32>
    %96 = vector.broadcast %95 : vector<8x1xf32> to vector<8x128xf32>
    %97 = arith.cmpf oeq, %93, %96 : vector<8x128xf32>
    %c128_i32_15 = arith.constant 128 : i32
    %98 = vector.broadcast %c128_i32_15 : i32 to vector<8x128xi32>
    %99 = arith.select %97, %6, %98 : vector<8x128xi1>, vector<8x128xi32>
    %cst_16 = arith.constant dense<2147483647> : vector<8xi32>
    %100 = vector.multi_reduction <minsi>, %99, %cst_16 [1] : vector<8x128xi32> to vector<8xi32>
    %101 = vector.shape_cast %100 : vector<8xi32> to vector<8x1xi32>
    %c2_i32 = arith.constant 2 : i32
    %102 = vector.broadcast %101 : vector<8x1xi32> to vector<8x128xi32>
    %103 = arith.cmpi eq, %6, %102 : vector<8x128xi32>
    %104 = arith.extui %103 : vector<8x128xi1> to vector<8x128xi32>
    %105 = arith.sitofp %104 : vector<8x128xi32> to vector<8x128xf32>
    %106 = arith.mulf %1, %105 : vector<8x128xf32>
    %cst_17 = arith.constant dense<0.000000e+00> : vector<8xf32>
    %107 = vector.multi_reduction <add>, %106, %cst_17 [1] : vector<8x128xf32> to vector<8xf32>
    %108 = vector.shape_cast %107 : vector<8xf32> to vector<8x1xf32>
    %109 = arith.mulf %3, %105 : vector<8x128xf32>
    %cst_18 = arith.constant dense<0.000000e+00> : vector<8xf32>
    %110 = vector.multi_reduction <add>, %109, %cst_18 [1] : vector<8x128xf32> to vector<8xf32>
    %111 = vector.shape_cast %110 : vector<8xf32> to vector<8x1xf32>
    %112 = arith.mulf %5, %105 : vector<8x128xf32>
    %cst_19 = arith.constant dense<0.000000e+00> : vector<8xf32>
    %113 = vector.multi_reduction <add>, %112, %cst_19 [1] : vector<8x128xf32> to vector<8xf32>
    %114 = vector.shape_cast %113 : vector<8xf32> to vector<8x1xf32>
    %115 = vector.broadcast %c2_i32 : i32 to vector<1x16xi32>
    %116 = arith.cmpi eq, %7, %115 : vector<1x16xi32>
    %117 = vector.shape_cast %116 : vector<1x16xi1> to vector<1x16xi1>
    %118 = vector.broadcast %117 : vector<1x16xi1> to vector<8x16xi1>
    %119 = vector.shape_cast %108 : vector<8x1xf32> to vector<8x1xf32>
    %120 = vector.broadcast %119 : vector<8x1xf32> to vector<8x16xf32>
    %121 = arith.select %118, %120, %71 : vector<8x16xi1>, vector<8x16xf32>
    %122 = vector.shape_cast %116 : vector<1x16xi1> to vector<1x16xi1>
    %123 = vector.broadcast %122 : vector<1x16xi1> to vector<8x16xi1>
    %124 = vector.shape_cast %111 : vector<8x1xf32> to vector<8x1xf32>
    %125 = vector.broadcast %124 : vector<8x1xf32> to vector<8x16xf32>
    %126 = arith.select %123, %125, %76 : vector<8x16xi1>, vector<8x16xf32>
    %127 = vector.shape_cast %116 : vector<1x16xi1> to vector<1x16xi1>
    %128 = vector.broadcast %127 : vector<1x16xi1> to vector<8x16xi1>
    %129 = vector.shape_cast %114 : vector<8x1xf32> to vector<8x1xf32>
    %130 = vector.broadcast %129 : vector<8x1xf32> to vector<8x16xf32>
    %131 = arith.select %128, %130, %81 : vector<8x16xi1>, vector<8x16xf32>
    %132 = vector.broadcast %108 : vector<8x1xf32> to vector<8x128xf32>
    %133 = arith.subf %1, %132 : vector<8x128xf32>
    %134 = arith.mulf %133, %133 : vector<8x128xf32>
    %135 = vector.broadcast %111 : vector<8x1xf32> to vector<8x128xf32>
    %136 = arith.subf %3, %135 : vector<8x128xf32>
    %137 = arith.mulf %136, %136 : vector<8x128xf32>
    %138 = arith.addf %134, %137 : vector<8x128xf32>
    %139 = vector.broadcast %114 : vector<8x1xf32> to vector<8x128xf32>
    %140 = arith.subf %5, %139 : vector<8x128xf32>
    %141 = arith.mulf %140, %140 : vector<8x128xf32>
    %142 = arith.addf %138, %141 : vector<8x128xf32>
    %143 = arith.minimumf %93, %142 : vector<8x128xf32>
    %cst_20 = arith.constant dense<0xFF800000> : vector<8xf32>
    %144 = vector.multi_reduction <maximumf>, %143, %cst_20 [1] : vector<8x128xf32> to vector<8xf32>
    %145 = vector.shape_cast %144 : vector<8xf32> to vector<8x1xf32>
    %146 = vector.broadcast %145 : vector<8x1xf32> to vector<8x128xf32>
    %147 = arith.cmpf oeq, %143, %146 : vector<8x128xf32>
    %c128_i32_21 = arith.constant 128 : i32
    %148 = vector.broadcast %c128_i32_21 : i32 to vector<8x128xi32>
    %149 = arith.select %147, %6, %148 : vector<8x128xi1>, vector<8x128xi32>
    %cst_22 = arith.constant dense<2147483647> : vector<8xi32>
    %150 = vector.multi_reduction <minsi>, %149, %cst_22 [1] : vector<8x128xi32> to vector<8xi32>
    %151 = vector.shape_cast %150 : vector<8xi32> to vector<8x1xi32>
    %c3_i32 = arith.constant 3 : i32
    %152 = vector.broadcast %151 : vector<8x1xi32> to vector<8x128xi32>
    %153 = arith.cmpi eq, %6, %152 : vector<8x128xi32>
    %154 = arith.extui %153 : vector<8x128xi1> to vector<8x128xi32>
    %155 = arith.sitofp %154 : vector<8x128xi32> to vector<8x128xf32>
    %156 = arith.mulf %1, %155 : vector<8x128xf32>
    %cst_23 = arith.constant dense<0.000000e+00> : vector<8xf32>
    %157 = vector.multi_reduction <add>, %156, %cst_23 [1] : vector<8x128xf32> to vector<8xf32>
    %158 = vector.shape_cast %157 : vector<8xf32> to vector<8x1xf32>
    %159 = arith.mulf %3, %155 : vector<8x128xf32>
    %cst_24 = arith.constant dense<0.000000e+00> : vector<8xf32>
    %160 = vector.multi_reduction <add>, %159, %cst_24 [1] : vector<8x128xf32> to vector<8xf32>
    %161 = vector.shape_cast %160 : vector<8xf32> to vector<8x1xf32>
    %162 = arith.mulf %5, %155 : vector<8x128xf32>
    %cst_25 = arith.constant dense<0.000000e+00> : vector<8xf32>
    %163 = vector.multi_reduction <add>, %162, %cst_25 [1] : vector<8x128xf32> to vector<8xf32>
    %164 = vector.shape_cast %163 : vector<8xf32> to vector<8x1xf32>
    %165 = vector.broadcast %c3_i32 : i32 to vector<1x16xi32>
    %166 = arith.cmpi eq, %7, %165 : vector<1x16xi32>
    %167 = vector.shape_cast %166 : vector<1x16xi1> to vector<1x16xi1>
    %168 = vector.broadcast %167 : vector<1x16xi1> to vector<8x16xi1>
    %169 = vector.shape_cast %158 : vector<8x1xf32> to vector<8x1xf32>
    %170 = vector.broadcast %169 : vector<8x1xf32> to vector<8x16xf32>
    %171 = arith.select %168, %170, %121 : vector<8x16xi1>, vector<8x16xf32>
    %172 = vector.shape_cast %166 : vector<1x16xi1> to vector<1x16xi1>
    %173 = vector.broadcast %172 : vector<1x16xi1> to vector<8x16xi1>
    %174 = vector.shape_cast %161 : vector<8x1xf32> to vector<8x1xf32>
    %175 = vector.broadcast %174 : vector<8x1xf32> to vector<8x16xf32>
    %176 = arith.select %173, %175, %126 : vector<8x16xi1>, vector<8x16xf32>
    %177 = vector.shape_cast %166 : vector<1x16xi1> to vector<1x16xi1>
    %178 = vector.broadcast %177 : vector<1x16xi1> to vector<8x16xi1>
    %179 = vector.shape_cast %164 : vector<8x1xf32> to vector<8x1xf32>
    %180 = vector.broadcast %179 : vector<8x1xf32> to vector<8x16xf32>
    %181 = arith.select %178, %180, %131 : vector<8x16xi1>, vector<8x16xf32>
    %182 = vector.broadcast %158 : vector<8x1xf32> to vector<8x128xf32>
    %183 = arith.subf %1, %182 : vector<8x128xf32>
    %184 = arith.mulf %183, %183 : vector<8x128xf32>
    %185 = vector.broadcast %161 : vector<8x1xf32> to vector<8x128xf32>
    %186 = arith.subf %3, %185 : vector<8x128xf32>
    %187 = arith.mulf %186, %186 : vector<8x128xf32>
    %188 = arith.addf %184, %187 : vector<8x128xf32>
    %189 = vector.broadcast %164 : vector<8x1xf32> to vector<8x128xf32>
    %190 = arith.subf %5, %189 : vector<8x128xf32>
    %191 = arith.mulf %190, %190 : vector<8x128xf32>
    %192 = arith.addf %188, %191 : vector<8x128xf32>
    %193 = arith.minimumf %143, %192 : vector<8x128xf32>
    %cst_26 = arith.constant dense<0xFF800000> : vector<8xf32>
    %194 = vector.multi_reduction <maximumf>, %193, %cst_26 [1] : vector<8x128xf32> to vector<8xf32>
    %195 = vector.shape_cast %194 : vector<8xf32> to vector<8x1xf32>
    %196 = vector.broadcast %195 : vector<8x1xf32> to vector<8x128xf32>
    %197 = arith.cmpf oeq, %193, %196 : vector<8x128xf32>
    %c128_i32_27 = arith.constant 128 : i32
    %198 = vector.broadcast %c128_i32_27 : i32 to vector<8x128xi32>
    %199 = arith.select %197, %6, %198 : vector<8x128xi1>, vector<8x128xi32>
    %cst_28 = arith.constant dense<2147483647> : vector<8xi32>
    %200 = vector.multi_reduction <minsi>, %199, %cst_28 [1] : vector<8x128xi32> to vector<8xi32>
    %201 = vector.shape_cast %200 : vector<8xi32> to vector<8x1xi32>
    %c4_i32 = arith.constant 4 : i32
    %202 = vector.broadcast %201 : vector<8x1xi32> to vector<8x128xi32>
    %203 = arith.cmpi eq, %6, %202 : vector<8x128xi32>
    %204 = arith.extui %203 : vector<8x128xi1> to vector<8x128xi32>
    %205 = arith.sitofp %204 : vector<8x128xi32> to vector<8x128xf32>
    %206 = arith.mulf %1, %205 : vector<8x128xf32>
    %cst_29 = arith.constant dense<0.000000e+00> : vector<8xf32>
    %207 = vector.multi_reduction <add>, %206, %cst_29 [1] : vector<8x128xf32> to vector<8xf32>
    %208 = vector.shape_cast %207 : vector<8xf32> to vector<8x1xf32>
    %209 = arith.mulf %3, %205 : vector<8x128xf32>
    %cst_30 = arith.constant dense<0.000000e+00> : vector<8xf32>
    %210 = vector.multi_reduction <add>, %209, %cst_30 [1] : vector<8x128xf32> to vector<8xf32>
    %211 = vector.shape_cast %210 : vector<8xf32> to vector<8x1xf32>
    %212 = arith.mulf %5, %205 : vector<8x128xf32>
    %cst_31 = arith.constant dense<0.000000e+00> : vector<8xf32>
    %213 = vector.multi_reduction <add>, %212, %cst_31 [1] : vector<8x128xf32> to vector<8xf32>
    %214 = vector.shape_cast %213 : vector<8xf32> to vector<8x1xf32>
    %215 = vector.broadcast %c4_i32 : i32 to vector<1x16xi32>
    %216 = arith.cmpi eq, %7, %215 : vector<1x16xi32>
    %217 = vector.shape_cast %216 : vector<1x16xi1> to vector<1x16xi1>
    %218 = vector.broadcast %217 : vector<1x16xi1> to vector<8x16xi1>
    %219 = vector.shape_cast %208 : vector<8x1xf32> to vector<8x1xf32>
    %220 = vector.broadcast %219 : vector<8x1xf32> to vector<8x16xf32>
    %221 = arith.select %218, %220, %171 : vector<8x16xi1>, vector<8x16xf32>
    %222 = vector.shape_cast %216 : vector<1x16xi1> to vector<1x16xi1>
    %223 = vector.broadcast %222 : vector<1x16xi1> to vector<8x16xi1>
    %224 = vector.shape_cast %211 : vector<8x1xf32> to vector<8x1xf32>
    %225 = vector.broadcast %224 : vector<8x1xf32> to vector<8x16xf32>
    %226 = arith.select %223, %225, %176 : vector<8x16xi1>, vector<8x16xf32>
    %227 = vector.shape_cast %216 : vector<1x16xi1> to vector<1x16xi1>
    %228 = vector.broadcast %227 : vector<1x16xi1> to vector<8x16xi1>
    %229 = vector.shape_cast %214 : vector<8x1xf32> to vector<8x1xf32>
    %230 = vector.broadcast %229 : vector<8x1xf32> to vector<8x16xf32>
    %231 = arith.select %228, %230, %181 : vector<8x16xi1>, vector<8x16xf32>
    %232 = vector.broadcast %208 : vector<8x1xf32> to vector<8x128xf32>
    %233 = arith.subf %1, %232 : vector<8x128xf32>
    %234 = arith.mulf %233, %233 : vector<8x128xf32>
    %235 = vector.broadcast %211 : vector<8x1xf32> to vector<8x128xf32>
    %236 = arith.subf %3, %235 : vector<8x128xf32>
    %237 = arith.mulf %236, %236 : vector<8x128xf32>
    %238 = arith.addf %234, %237 : vector<8x128xf32>
    %239 = vector.broadcast %214 : vector<8x1xf32> to vector<8x128xf32>
    %240 = arith.subf %5, %239 : vector<8x128xf32>
    %241 = arith.mulf %240, %240 : vector<8x128xf32>
    %242 = arith.addf %238, %241 : vector<8x128xf32>
    %243 = arith.minimumf %193, %242 : vector<8x128xf32>
    %cst_32 = arith.constant dense<0xFF800000> : vector<8xf32>
    %244 = vector.multi_reduction <maximumf>, %243, %cst_32 [1] : vector<8x128xf32> to vector<8xf32>
    %245 = vector.shape_cast %244 : vector<8xf32> to vector<8x1xf32>
    %246 = vector.broadcast %245 : vector<8x1xf32> to vector<8x128xf32>
    %247 = arith.cmpf oeq, %243, %246 : vector<8x128xf32>
    %c128_i32_33 = arith.constant 128 : i32
    %248 = vector.broadcast %c128_i32_33 : i32 to vector<8x128xi32>
    %249 = arith.select %247, %6, %248 : vector<8x128xi1>, vector<8x128xi32>
    %cst_34 = arith.constant dense<2147483647> : vector<8xi32>
    %250 = vector.multi_reduction <minsi>, %249, %cst_34 [1] : vector<8x128xi32> to vector<8xi32>
    %251 = vector.shape_cast %250 : vector<8xi32> to vector<8x1xi32>
    %c5_i32 = arith.constant 5 : i32
    %252 = vector.broadcast %251 : vector<8x1xi32> to vector<8x128xi32>
    %253 = arith.cmpi eq, %6, %252 : vector<8x128xi32>
    %254 = arith.extui %253 : vector<8x128xi1> to vector<8x128xi32>
    %255 = arith.sitofp %254 : vector<8x128xi32> to vector<8x128xf32>
    %256 = arith.mulf %1, %255 : vector<8x128xf32>
    %cst_35 = arith.constant dense<0.000000e+00> : vector<8xf32>
    %257 = vector.multi_reduction <add>, %256, %cst_35 [1] : vector<8x128xf32> to vector<8xf32>
    %258 = vector.shape_cast %257 : vector<8xf32> to vector<8x1xf32>
    %259 = arith.mulf %3, %255 : vector<8x128xf32>
    %cst_36 = arith.constant dense<0.000000e+00> : vector<8xf32>
    %260 = vector.multi_reduction <add>, %259, %cst_36 [1] : vector<8x128xf32> to vector<8xf32>
    %261 = vector.shape_cast %260 : vector<8xf32> to vector<8x1xf32>
    %262 = arith.mulf %5, %255 : vector<8x128xf32>
    %cst_37 = arith.constant dense<0.000000e+00> : vector<8xf32>
    %263 = vector.multi_reduction <add>, %262, %cst_37 [1] : vector<8x128xf32> to vector<8xf32>
    %264 = vector.shape_cast %263 : vector<8xf32> to vector<8x1xf32>
    %265 = vector.broadcast %c5_i32 : i32 to vector<1x16xi32>
    %266 = arith.cmpi eq, %7, %265 : vector<1x16xi32>
    %267 = vector.shape_cast %266 : vector<1x16xi1> to vector<1x16xi1>
    %268 = vector.broadcast %267 : vector<1x16xi1> to vector<8x16xi1>
    %269 = vector.shape_cast %258 : vector<8x1xf32> to vector<8x1xf32>
    %270 = vector.broadcast %269 : vector<8x1xf32> to vector<8x16xf32>
    %271 = arith.select %268, %270, %221 : vector<8x16xi1>, vector<8x16xf32>
    %272 = vector.shape_cast %266 : vector<1x16xi1> to vector<1x16xi1>
    %273 = vector.broadcast %272 : vector<1x16xi1> to vector<8x16xi1>
    %274 = vector.shape_cast %261 : vector<8x1xf32> to vector<8x1xf32>
    %275 = vector.broadcast %274 : vector<8x1xf32> to vector<8x16xf32>
    %276 = arith.select %273, %275, %226 : vector<8x16xi1>, vector<8x16xf32>
    %277 = vector.shape_cast %266 : vector<1x16xi1> to vector<1x16xi1>
    %278 = vector.broadcast %277 : vector<1x16xi1> to vector<8x16xi1>
    %279 = vector.shape_cast %264 : vector<8x1xf32> to vector<8x1xf32>
    %280 = vector.broadcast %279 : vector<8x1xf32> to vector<8x16xf32>
    %281 = arith.select %278, %280, %231 : vector<8x16xi1>, vector<8x16xf32>
    %282 = vector.broadcast %258 : vector<8x1xf32> to vector<8x128xf32>
    %283 = arith.subf %1, %282 : vector<8x128xf32>
    %284 = arith.mulf %283, %283 : vector<8x128xf32>
    %285 = vector.broadcast %261 : vector<8x1xf32> to vector<8x128xf32>
    %286 = arith.subf %3, %285 : vector<8x128xf32>
    %287 = arith.mulf %286, %286 : vector<8x128xf32>
    %288 = arith.addf %284, %287 : vector<8x128xf32>
    %289 = vector.broadcast %264 : vector<8x1xf32> to vector<8x128xf32>
    %290 = arith.subf %5, %289 : vector<8x128xf32>
    %291 = arith.mulf %290, %290 : vector<8x128xf32>
    %292 = arith.addf %288, %291 : vector<8x128xf32>
    %293 = arith.minimumf %243, %292 : vector<8x128xf32>
    %cst_38 = arith.constant dense<0xFF800000> : vector<8xf32>
    %294 = vector.multi_reduction <maximumf>, %293, %cst_38 [1] : vector<8x128xf32> to vector<8xf32>
    %295 = vector.shape_cast %294 : vector<8xf32> to vector<8x1xf32>
    %296 = vector.broadcast %295 : vector<8x1xf32> to vector<8x128xf32>
    %297 = arith.cmpf oeq, %293, %296 : vector<8x128xf32>
    %c128_i32_39 = arith.constant 128 : i32
    %298 = vector.broadcast %c128_i32_39 : i32 to vector<8x128xi32>
    %299 = arith.select %297, %6, %298 : vector<8x128xi1>, vector<8x128xi32>
    %cst_40 = arith.constant dense<2147483647> : vector<8xi32>
    %300 = vector.multi_reduction <minsi>, %299, %cst_40 [1] : vector<8x128xi32> to vector<8xi32>
    %301 = vector.shape_cast %300 : vector<8xi32> to vector<8x1xi32>
    %c6_i32 = arith.constant 6 : i32
    %302 = vector.broadcast %301 : vector<8x1xi32> to vector<8x128xi32>
    %303 = arith.cmpi eq, %6, %302 : vector<8x128xi32>
    %304 = arith.extui %303 : vector<8x128xi1> to vector<8x128xi32>
    %305 = arith.sitofp %304 : vector<8x128xi32> to vector<8x128xf32>
    %306 = arith.mulf %1, %305 : vector<8x128xf32>
    %cst_41 = arith.constant dense<0.000000e+00> : vector<8xf32>
    %307 = vector.multi_reduction <add>, %306, %cst_41 [1] : vector<8x128xf32> to vector<8xf32>
    %308 = vector.shape_cast %307 : vector<8xf32> to vector<8x1xf32>
    %309 = arith.mulf %3, %305 : vector<8x128xf32>
    %cst_42 = arith.constant dense<0.000000e+00> : vector<8xf32>
    %310 = vector.multi_reduction <add>, %309, %cst_42 [1] : vector<8x128xf32> to vector<8xf32>
    %311 = vector.shape_cast %310 : vector<8xf32> to vector<8x1xf32>
    %312 = arith.mulf %5, %305 : vector<8x128xf32>
    %cst_43 = arith.constant dense<0.000000e+00> : vector<8xf32>
    %313 = vector.multi_reduction <add>, %312, %cst_43 [1] : vector<8x128xf32> to vector<8xf32>
    %314 = vector.shape_cast %313 : vector<8xf32> to vector<8x1xf32>
    %315 = vector.broadcast %c6_i32 : i32 to vector<1x16xi32>
    %316 = arith.cmpi eq, %7, %315 : vector<1x16xi32>
    %317 = vector.shape_cast %316 : vector<1x16xi1> to vector<1x16xi1>
    %318 = vector.broadcast %317 : vector<1x16xi1> to vector<8x16xi1>
    %319 = vector.shape_cast %308 : vector<8x1xf32> to vector<8x1xf32>
    %320 = vector.broadcast %319 : vector<8x1xf32> to vector<8x16xf32>
    %321 = arith.select %318, %320, %271 : vector<8x16xi1>, vector<8x16xf32>
    %322 = vector.shape_cast %316 : vector<1x16xi1> to vector<1x16xi1>
    %323 = vector.broadcast %322 : vector<1x16xi1> to vector<8x16xi1>
    %324 = vector.shape_cast %311 : vector<8x1xf32> to vector<8x1xf32>
    %325 = vector.broadcast %324 : vector<8x1xf32> to vector<8x16xf32>
    %326 = arith.select %323, %325, %276 : vector<8x16xi1>, vector<8x16xf32>
    %327 = vector.shape_cast %316 : vector<1x16xi1> to vector<1x16xi1>
    %328 = vector.broadcast %327 : vector<1x16xi1> to vector<8x16xi1>
    %329 = vector.shape_cast %314 : vector<8x1xf32> to vector<8x1xf32>
    %330 = vector.broadcast %329 : vector<8x1xf32> to vector<8x16xf32>
    %331 = arith.select %328, %330, %281 : vector<8x16xi1>, vector<8x16xf32>
    %332 = vector.broadcast %308 : vector<8x1xf32> to vector<8x128xf32>
    %333 = arith.subf %1, %332 : vector<8x128xf32>
    %334 = arith.mulf %333, %333 : vector<8x128xf32>
    %335 = vector.broadcast %311 : vector<8x1xf32> to vector<8x128xf32>
    %336 = arith.subf %3, %335 : vector<8x128xf32>
    %337 = arith.mulf %336, %336 : vector<8x128xf32>
    %338 = arith.addf %334, %337 : vector<8x128xf32>
    %339 = vector.broadcast %314 : vector<8x1xf32> to vector<8x128xf32>
    %340 = arith.subf %5, %339 : vector<8x128xf32>
    %341 = arith.mulf %340, %340 : vector<8x128xf32>
    %342 = arith.addf %338, %341 : vector<8x128xf32>
    %343 = arith.minimumf %293, %342 : vector<8x128xf32>
    %cst_44 = arith.constant dense<0xFF800000> : vector<8xf32>
    %344 = vector.multi_reduction <maximumf>, %343, %cst_44 [1] : vector<8x128xf32> to vector<8xf32>
    %345 = vector.shape_cast %344 : vector<8xf32> to vector<8x1xf32>
    %346 = vector.broadcast %345 : vector<8x1xf32> to vector<8x128xf32>
    %347 = arith.cmpf oeq, %343, %346 : vector<8x128xf32>
    %c128_i32_45 = arith.constant 128 : i32
    %348 = vector.broadcast %c128_i32_45 : i32 to vector<8x128xi32>
    %349 = arith.select %347, %6, %348 : vector<8x128xi1>, vector<8x128xi32>
    %cst_46 = arith.constant dense<2147483647> : vector<8xi32>
    %350 = vector.multi_reduction <minsi>, %349, %cst_46 [1] : vector<8x128xi32> to vector<8xi32>
    %351 = vector.shape_cast %350 : vector<8xi32> to vector<8x1xi32>
    %c7_i32 = arith.constant 7 : i32
    %352 = vector.broadcast %351 : vector<8x1xi32> to vector<8x128xi32>
    %353 = arith.cmpi eq, %6, %352 : vector<8x128xi32>
    %354 = arith.extui %353 : vector<8x128xi1> to vector<8x128xi32>
    %355 = arith.sitofp %354 : vector<8x128xi32> to vector<8x128xf32>
    %356 = arith.mulf %1, %355 : vector<8x128xf32>
    %cst_47 = arith.constant dense<0.000000e+00> : vector<8xf32>
    %357 = vector.multi_reduction <add>, %356, %cst_47 [1] : vector<8x128xf32> to vector<8xf32>
    %358 = vector.shape_cast %357 : vector<8xf32> to vector<8x1xf32>
    %359 = arith.mulf %3, %355 : vector<8x128xf32>
    %cst_48 = arith.constant dense<0.000000e+00> : vector<8xf32>
    %360 = vector.multi_reduction <add>, %359, %cst_48 [1] : vector<8x128xf32> to vector<8xf32>
    %361 = vector.shape_cast %360 : vector<8xf32> to vector<8x1xf32>
    %362 = arith.mulf %5, %355 : vector<8x128xf32>
    %cst_49 = arith.constant dense<0.000000e+00> : vector<8xf32>
    %363 = vector.multi_reduction <add>, %362, %cst_49 [1] : vector<8x128xf32> to vector<8xf32>
    %364 = vector.shape_cast %363 : vector<8xf32> to vector<8x1xf32>
    %365 = vector.broadcast %c7_i32 : i32 to vector<1x16xi32>
    %366 = arith.cmpi eq, %7, %365 : vector<1x16xi32>
    %367 = vector.shape_cast %366 : vector<1x16xi1> to vector<1x16xi1>
    %368 = vector.broadcast %367 : vector<1x16xi1> to vector<8x16xi1>
    %369 = vector.shape_cast %358 : vector<8x1xf32> to vector<8x1xf32>
    %370 = vector.broadcast %369 : vector<8x1xf32> to vector<8x16xf32>
    %371 = arith.select %368, %370, %321 : vector<8x16xi1>, vector<8x16xf32>
    %372 = vector.shape_cast %366 : vector<1x16xi1> to vector<1x16xi1>
    %373 = vector.broadcast %372 : vector<1x16xi1> to vector<8x16xi1>
    %374 = vector.shape_cast %361 : vector<8x1xf32> to vector<8x1xf32>
    %375 = vector.broadcast %374 : vector<8x1xf32> to vector<8x16xf32>
    %376 = arith.select %373, %375, %326 : vector<8x16xi1>, vector<8x16xf32>
    %377 = vector.shape_cast %366 : vector<1x16xi1> to vector<1x16xi1>
    %378 = vector.broadcast %377 : vector<1x16xi1> to vector<8x16xi1>
    %379 = vector.shape_cast %364 : vector<8x1xf32> to vector<8x1xf32>
    %380 = vector.broadcast %379 : vector<8x1xf32> to vector<8x16xf32>
    %381 = arith.select %378, %380, %331 : vector<8x16xi1>, vector<8x16xf32>
    %382 = vector.broadcast %358 : vector<8x1xf32> to vector<8x128xf32>
    %383 = arith.subf %1, %382 : vector<8x128xf32>
    %384 = arith.mulf %383, %383 : vector<8x128xf32>
    %385 = vector.broadcast %361 : vector<8x1xf32> to vector<8x128xf32>
    %386 = arith.subf %3, %385 : vector<8x128xf32>
    %387 = arith.mulf %386, %386 : vector<8x128xf32>
    %388 = arith.addf %384, %387 : vector<8x128xf32>
    %389 = vector.broadcast %364 : vector<8x1xf32> to vector<8x128xf32>
    %390 = arith.subf %5, %389 : vector<8x128xf32>
    %391 = arith.mulf %390, %390 : vector<8x128xf32>
    %392 = arith.addf %388, %391 : vector<8x128xf32>
    %393 = arith.minimumf %343, %392 : vector<8x128xf32>
    %cst_50 = arith.constant dense<0xFF800000> : vector<8xf32>
    %394 = vector.multi_reduction <maximumf>, %393, %cst_50 [1] : vector<8x128xf32> to vector<8xf32>
    %395 = vector.shape_cast %394 : vector<8xf32> to vector<8x1xf32>
    %396 = vector.broadcast %395 : vector<8x1xf32> to vector<8x128xf32>
    %397 = arith.cmpf oeq, %393, %396 : vector<8x128xf32>
    %c128_i32_51 = arith.constant 128 : i32
    %398 = vector.broadcast %c128_i32_51 : i32 to vector<8x128xi32>
    %399 = arith.select %397, %6, %398 : vector<8x128xi1>, vector<8x128xi32>
    %cst_52 = arith.constant dense<2147483647> : vector<8xi32>
    %400 = vector.multi_reduction <minsi>, %399, %cst_52 [1] : vector<8x128xi32> to vector<8xi32>
    %401 = vector.shape_cast %400 : vector<8xi32> to vector<8x1xi32>
    %c8_i32 = arith.constant 8 : i32
    %402 = vector.broadcast %401 : vector<8x1xi32> to vector<8x128xi32>
    %403 = arith.cmpi eq, %6, %402 : vector<8x128xi32>
    %404 = arith.extui %403 : vector<8x128xi1> to vector<8x128xi32>
    %405 = arith.sitofp %404 : vector<8x128xi32> to vector<8x128xf32>
    %406 = arith.mulf %1, %405 : vector<8x128xf32>
    %cst_53 = arith.constant dense<0.000000e+00> : vector<8xf32>
    %407 = vector.multi_reduction <add>, %406, %cst_53 [1] : vector<8x128xf32> to vector<8xf32>
    %408 = vector.shape_cast %407 : vector<8xf32> to vector<8x1xf32>
    %409 = arith.mulf %3, %405 : vector<8x128xf32>
    %cst_54 = arith.constant dense<0.000000e+00> : vector<8xf32>
    %410 = vector.multi_reduction <add>, %409, %cst_54 [1] : vector<8x128xf32> to vector<8xf32>
    %411 = vector.shape_cast %410 : vector<8xf32> to vector<8x1xf32>
    %412 = arith.mulf %5, %405 : vector<8x128xf32>
    %cst_55 = arith.constant dense<0.000000e+00> : vector<8xf32>
    %413 = vector.multi_reduction <add>, %412, %cst_55 [1] : vector<8x128xf32> to vector<8xf32>
    %414 = vector.shape_cast %413 : vector<8xf32> to vector<8x1xf32>
    %415 = vector.broadcast %c8_i32 : i32 to vector<1x16xi32>
    %416 = arith.cmpi eq, %7, %415 : vector<1x16xi32>
    %417 = vector.shape_cast %416 : vector<1x16xi1> to vector<1x16xi1>
    %418 = vector.broadcast %417 : vector<1x16xi1> to vector<8x16xi1>
    %419 = vector.shape_cast %408 : vector<8x1xf32> to vector<8x1xf32>
    %420 = vector.broadcast %419 : vector<8x1xf32> to vector<8x16xf32>
    %421 = arith.select %418, %420, %371 : vector<8x16xi1>, vector<8x16xf32>
    %422 = vector.shape_cast %416 : vector<1x16xi1> to vector<1x16xi1>
    %423 = vector.broadcast %422 : vector<1x16xi1> to vector<8x16xi1>
    %424 = vector.shape_cast %411 : vector<8x1xf32> to vector<8x1xf32>
    %425 = vector.broadcast %424 : vector<8x1xf32> to vector<8x16xf32>
    %426 = arith.select %423, %425, %376 : vector<8x16xi1>, vector<8x16xf32>
    %427 = vector.shape_cast %416 : vector<1x16xi1> to vector<1x16xi1>
    %428 = vector.broadcast %427 : vector<1x16xi1> to vector<8x16xi1>
    %429 = vector.shape_cast %414 : vector<8x1xf32> to vector<8x1xf32>
    %430 = vector.broadcast %429 : vector<8x1xf32> to vector<8x16xf32>
    %431 = arith.select %428, %430, %381 : vector<8x16xi1>, vector<8x16xf32>
    %432 = vector.broadcast %408 : vector<8x1xf32> to vector<8x128xf32>
    %433 = arith.subf %1, %432 : vector<8x128xf32>
    %434 = arith.mulf %433, %433 : vector<8x128xf32>
    %435 = vector.broadcast %411 : vector<8x1xf32> to vector<8x128xf32>
    %436 = arith.subf %3, %435 : vector<8x128xf32>
    %437 = arith.mulf %436, %436 : vector<8x128xf32>
    %438 = arith.addf %434, %437 : vector<8x128xf32>
    %439 = vector.broadcast %414 : vector<8x1xf32> to vector<8x128xf32>
    %440 = arith.subf %5, %439 : vector<8x128xf32>
    %441 = arith.mulf %440, %440 : vector<8x128xf32>
    %442 = arith.addf %438, %441 : vector<8x128xf32>
    %443 = arith.minimumf %393, %442 : vector<8x128xf32>
    %cst_56 = arith.constant dense<0xFF800000> : vector<8xf32>
    %444 = vector.multi_reduction <maximumf>, %443, %cst_56 [1] : vector<8x128xf32> to vector<8xf32>
    %445 = vector.shape_cast %444 : vector<8xf32> to vector<8x1xf32>
    %446 = vector.broadcast %445 : vector<8x1xf32> to vector<8x128xf32>
    %447 = arith.cmpf oeq, %443, %446 : vector<8x128xf32>
    %c128_i32_57 = arith.constant 128 : i32
    %448 = vector.broadcast %c128_i32_57 : i32 to vector<8x128xi32>
    %449 = arith.select %447, %6, %448 : vector<8x128xi1>, vector<8x128xi32>
    %cst_58 = arith.constant dense<2147483647> : vector<8xi32>
    %450 = vector.multi_reduction <minsi>, %449, %cst_58 [1] : vector<8x128xi32> to vector<8xi32>
    %451 = vector.shape_cast %450 : vector<8xi32> to vector<8x1xi32>
    %c9_i32 = arith.constant 9 : i32
    %452 = vector.broadcast %451 : vector<8x1xi32> to vector<8x128xi32>
    %453 = arith.cmpi eq, %6, %452 : vector<8x128xi32>
    %454 = arith.extui %453 : vector<8x128xi1> to vector<8x128xi32>
    %455 = arith.sitofp %454 : vector<8x128xi32> to vector<8x128xf32>
    %456 = arith.mulf %1, %455 : vector<8x128xf32>
    %cst_59 = arith.constant dense<0.000000e+00> : vector<8xf32>
    %457 = vector.multi_reduction <add>, %456, %cst_59 [1] : vector<8x128xf32> to vector<8xf32>
    %458 = vector.shape_cast %457 : vector<8xf32> to vector<8x1xf32>
    %459 = arith.mulf %3, %455 : vector<8x128xf32>
    %cst_60 = arith.constant dense<0.000000e+00> : vector<8xf32>
    %460 = vector.multi_reduction <add>, %459, %cst_60 [1] : vector<8x128xf32> to vector<8xf32>
    %461 = vector.shape_cast %460 : vector<8xf32> to vector<8x1xf32>
    %462 = arith.mulf %5, %455 : vector<8x128xf32>
    %cst_61 = arith.constant dense<0.000000e+00> : vector<8xf32>
    %463 = vector.multi_reduction <add>, %462, %cst_61 [1] : vector<8x128xf32> to vector<8xf32>
    %464 = vector.shape_cast %463 : vector<8xf32> to vector<8x1xf32>
    %465 = vector.broadcast %c9_i32 : i32 to vector<1x16xi32>
    %466 = arith.cmpi eq, %7, %465 : vector<1x16xi32>
    %467 = vector.shape_cast %466 : vector<1x16xi1> to vector<1x16xi1>
    %468 = vector.broadcast %467 : vector<1x16xi1> to vector<8x16xi1>
    %469 = vector.shape_cast %458 : vector<8x1xf32> to vector<8x1xf32>
    %470 = vector.broadcast %469 : vector<8x1xf32> to vector<8x16xf32>
    %471 = arith.select %468, %470, %421 : vector<8x16xi1>, vector<8x16xf32>
    %472 = vector.shape_cast %466 : vector<1x16xi1> to vector<1x16xi1>
    %473 = vector.broadcast %472 : vector<1x16xi1> to vector<8x16xi1>
    %474 = vector.shape_cast %461 : vector<8x1xf32> to vector<8x1xf32>
    %475 = vector.broadcast %474 : vector<8x1xf32> to vector<8x16xf32>
    %476 = arith.select %473, %475, %426 : vector<8x16xi1>, vector<8x16xf32>
    %477 = vector.shape_cast %466 : vector<1x16xi1> to vector<1x16xi1>
    %478 = vector.broadcast %477 : vector<1x16xi1> to vector<8x16xi1>
    %479 = vector.shape_cast %464 : vector<8x1xf32> to vector<8x1xf32>
    %480 = vector.broadcast %479 : vector<8x1xf32> to vector<8x16xf32>
    %481 = arith.select %478, %480, %431 : vector<8x16xi1>, vector<8x16xf32>
    %482 = vector.broadcast %458 : vector<8x1xf32> to vector<8x128xf32>
    %483 = arith.subf %1, %482 : vector<8x128xf32>
    %484 = arith.mulf %483, %483 : vector<8x128xf32>
    %485 = vector.broadcast %461 : vector<8x1xf32> to vector<8x128xf32>
    %486 = arith.subf %3, %485 : vector<8x128xf32>
    %487 = arith.mulf %486, %486 : vector<8x128xf32>
    %488 = arith.addf %484, %487 : vector<8x128xf32>
    %489 = vector.broadcast %464 : vector<8x1xf32> to vector<8x128xf32>
    %490 = arith.subf %5, %489 : vector<8x128xf32>
    %491 = arith.mulf %490, %490 : vector<8x128xf32>
    %492 = arith.addf %488, %491 : vector<8x128xf32>
    %493 = arith.minimumf %443, %492 : vector<8x128xf32>
    %cst_62 = arith.constant dense<0xFF800000> : vector<8xf32>
    %494 = vector.multi_reduction <maximumf>, %493, %cst_62 [1] : vector<8x128xf32> to vector<8xf32>
    %495 = vector.shape_cast %494 : vector<8xf32> to vector<8x1xf32>
    %496 = vector.broadcast %495 : vector<8x1xf32> to vector<8x128xf32>
    %497 = arith.cmpf oeq, %493, %496 : vector<8x128xf32>
    %c128_i32_63 = arith.constant 128 : i32
    %498 = vector.broadcast %c128_i32_63 : i32 to vector<8x128xi32>
    %499 = arith.select %497, %6, %498 : vector<8x128xi1>, vector<8x128xi32>
    %cst_64 = arith.constant dense<2147483647> : vector<8xi32>
    %500 = vector.multi_reduction <minsi>, %499, %cst_64 [1] : vector<8x128xi32> to vector<8xi32>
    %501 = vector.shape_cast %500 : vector<8xi32> to vector<8x1xi32>
    %c10_i32 = arith.constant 10 : i32
    %502 = vector.broadcast %501 : vector<8x1xi32> to vector<8x128xi32>
    %503 = arith.cmpi eq, %6, %502 : vector<8x128xi32>
    %504 = arith.extui %503 : vector<8x128xi1> to vector<8x128xi32>
    %505 = arith.sitofp %504 : vector<8x128xi32> to vector<8x128xf32>
    %506 = arith.mulf %1, %505 : vector<8x128xf32>
    %cst_65 = arith.constant dense<0.000000e+00> : vector<8xf32>
    %507 = vector.multi_reduction <add>, %506, %cst_65 [1] : vector<8x128xf32> to vector<8xf32>
    %508 = vector.shape_cast %507 : vector<8xf32> to vector<8x1xf32>
    %509 = arith.mulf %3, %505 : vector<8x128xf32>
    %cst_66 = arith.constant dense<0.000000e+00> : vector<8xf32>
    %510 = vector.multi_reduction <add>, %509, %cst_66 [1] : vector<8x128xf32> to vector<8xf32>
    %511 = vector.shape_cast %510 : vector<8xf32> to vector<8x1xf32>
    %512 = arith.mulf %5, %505 : vector<8x128xf32>
    %cst_67 = arith.constant dense<0.000000e+00> : vector<8xf32>
    %513 = vector.multi_reduction <add>, %512, %cst_67 [1] : vector<8x128xf32> to vector<8xf32>
    %514 = vector.shape_cast %513 : vector<8xf32> to vector<8x1xf32>
    %515 = vector.broadcast %c10_i32 : i32 to vector<1x16xi32>
    %516 = arith.cmpi eq, %7, %515 : vector<1x16xi32>
    %517 = vector.shape_cast %516 : vector<1x16xi1> to vector<1x16xi1>
    %518 = vector.broadcast %517 : vector<1x16xi1> to vector<8x16xi1>
    %519 = vector.shape_cast %508 : vector<8x1xf32> to vector<8x1xf32>
    %520 = vector.broadcast %519 : vector<8x1xf32> to vector<8x16xf32>
    %521 = arith.select %518, %520, %471 : vector<8x16xi1>, vector<8x16xf32>
    %522 = vector.shape_cast %516 : vector<1x16xi1> to vector<1x16xi1>
    %523 = vector.broadcast %522 : vector<1x16xi1> to vector<8x16xi1>
    %524 = vector.shape_cast %511 : vector<8x1xf32> to vector<8x1xf32>
    %525 = vector.broadcast %524 : vector<8x1xf32> to vector<8x16xf32>
    %526 = arith.select %523, %525, %476 : vector<8x16xi1>, vector<8x16xf32>
    %527 = vector.shape_cast %516 : vector<1x16xi1> to vector<1x16xi1>
    %528 = vector.broadcast %527 : vector<1x16xi1> to vector<8x16xi1>
    %529 = vector.shape_cast %514 : vector<8x1xf32> to vector<8x1xf32>
    %530 = vector.broadcast %529 : vector<8x1xf32> to vector<8x16xf32>
    %531 = arith.select %528, %530, %481 : vector<8x16xi1>, vector<8x16xf32>
    %532 = vector.broadcast %508 : vector<8x1xf32> to vector<8x128xf32>
    %533 = arith.subf %1, %532 : vector<8x128xf32>
    %534 = arith.mulf %533, %533 : vector<8x128xf32>
    %535 = vector.broadcast %511 : vector<8x1xf32> to vector<8x128xf32>
    %536 = arith.subf %3, %535 : vector<8x128xf32>
    %537 = arith.mulf %536, %536 : vector<8x128xf32>
    %538 = arith.addf %534, %537 : vector<8x128xf32>
    %539 = vector.broadcast %514 : vector<8x1xf32> to vector<8x128xf32>
    %540 = arith.subf %5, %539 : vector<8x128xf32>
    %541 = arith.mulf %540, %540 : vector<8x128xf32>
    %542 = arith.addf %538, %541 : vector<8x128xf32>
    %543 = arith.minimumf %493, %542 : vector<8x128xf32>
    %cst_68 = arith.constant dense<0xFF800000> : vector<8xf32>
    %544 = vector.multi_reduction <maximumf>, %543, %cst_68 [1] : vector<8x128xf32> to vector<8xf32>
    %545 = vector.shape_cast %544 : vector<8xf32> to vector<8x1xf32>
    %546 = vector.broadcast %545 : vector<8x1xf32> to vector<8x128xf32>
    %547 = arith.cmpf oeq, %543, %546 : vector<8x128xf32>
    %c128_i32_69 = arith.constant 128 : i32
    %548 = vector.broadcast %c128_i32_69 : i32 to vector<8x128xi32>
    %549 = arith.select %547, %6, %548 : vector<8x128xi1>, vector<8x128xi32>
    %cst_70 = arith.constant dense<2147483647> : vector<8xi32>
    %550 = vector.multi_reduction <minsi>, %549, %cst_70 [1] : vector<8x128xi32> to vector<8xi32>
    %551 = vector.shape_cast %550 : vector<8xi32> to vector<8x1xi32>
    %c11_i32 = arith.constant 11 : i32
    %552 = vector.broadcast %551 : vector<8x1xi32> to vector<8x128xi32>
    %553 = arith.cmpi eq, %6, %552 : vector<8x128xi32>
    %554 = arith.extui %553 : vector<8x128xi1> to vector<8x128xi32>
    %555 = arith.sitofp %554 : vector<8x128xi32> to vector<8x128xf32>
    %556 = arith.mulf %1, %555 : vector<8x128xf32>
    %cst_71 = arith.constant dense<0.000000e+00> : vector<8xf32>
    %557 = vector.multi_reduction <add>, %556, %cst_71 [1] : vector<8x128xf32> to vector<8xf32>
    %558 = vector.shape_cast %557 : vector<8xf32> to vector<8x1xf32>
    %559 = arith.mulf %3, %555 : vector<8x128xf32>
    %cst_72 = arith.constant dense<0.000000e+00> : vector<8xf32>
    %560 = vector.multi_reduction <add>, %559, %cst_72 [1] : vector<8x128xf32> to vector<8xf32>
    %561 = vector.shape_cast %560 : vector<8xf32> to vector<8x1xf32>
    %562 = arith.mulf %5, %555 : vector<8x128xf32>
    %cst_73 = arith.constant dense<0.000000e+00> : vector<8xf32>
    %563 = vector.multi_reduction <add>, %562, %cst_73 [1] : vector<8x128xf32> to vector<8xf32>
    %564 = vector.shape_cast %563 : vector<8xf32> to vector<8x1xf32>
    %565 = vector.broadcast %c11_i32 : i32 to vector<1x16xi32>
    %566 = arith.cmpi eq, %7, %565 : vector<1x16xi32>
    %567 = vector.shape_cast %566 : vector<1x16xi1> to vector<1x16xi1>
    %568 = vector.broadcast %567 : vector<1x16xi1> to vector<8x16xi1>
    %569 = vector.shape_cast %558 : vector<8x1xf32> to vector<8x1xf32>
    %570 = vector.broadcast %569 : vector<8x1xf32> to vector<8x16xf32>
    %571 = arith.select %568, %570, %521 : vector<8x16xi1>, vector<8x16xf32>
    %572 = vector.shape_cast %566 : vector<1x16xi1> to vector<1x16xi1>
    %573 = vector.broadcast %572 : vector<1x16xi1> to vector<8x16xi1>
    %574 = vector.shape_cast %561 : vector<8x1xf32> to vector<8x1xf32>
    %575 = vector.broadcast %574 : vector<8x1xf32> to vector<8x16xf32>
    %576 = arith.select %573, %575, %526 : vector<8x16xi1>, vector<8x16xf32>
    %577 = vector.shape_cast %566 : vector<1x16xi1> to vector<1x16xi1>
    %578 = vector.broadcast %577 : vector<1x16xi1> to vector<8x16xi1>
    %579 = vector.shape_cast %564 : vector<8x1xf32> to vector<8x1xf32>
    %580 = vector.broadcast %579 : vector<8x1xf32> to vector<8x16xf32>
    %581 = arith.select %578, %580, %531 : vector<8x16xi1>, vector<8x16xf32>
    %582 = vector.broadcast %558 : vector<8x1xf32> to vector<8x128xf32>
    %583 = arith.subf %1, %582 : vector<8x128xf32>
    %584 = arith.mulf %583, %583 : vector<8x128xf32>
    %585 = vector.broadcast %561 : vector<8x1xf32> to vector<8x128xf32>
    %586 = arith.subf %3, %585 : vector<8x128xf32>
    %587 = arith.mulf %586, %586 : vector<8x128xf32>
    %588 = arith.addf %584, %587 : vector<8x128xf32>
    %589 = vector.broadcast %564 : vector<8x1xf32> to vector<8x128xf32>
    %590 = arith.subf %5, %589 : vector<8x128xf32>
    %591 = arith.mulf %590, %590 : vector<8x128xf32>
    %592 = arith.addf %588, %591 : vector<8x128xf32>
    %593 = arith.minimumf %543, %592 : vector<8x128xf32>
    %cst_74 = arith.constant dense<0xFF800000> : vector<8xf32>
    %594 = vector.multi_reduction <maximumf>, %593, %cst_74 [1] : vector<8x128xf32> to vector<8xf32>
    %595 = vector.shape_cast %594 : vector<8xf32> to vector<8x1xf32>
    %596 = vector.broadcast %595 : vector<8x1xf32> to vector<8x128xf32>
    %597 = arith.cmpf oeq, %593, %596 : vector<8x128xf32>
    %c128_i32_75 = arith.constant 128 : i32
    %598 = vector.broadcast %c128_i32_75 : i32 to vector<8x128xi32>
    %599 = arith.select %597, %6, %598 : vector<8x128xi1>, vector<8x128xi32>
    %cst_76 = arith.constant dense<2147483647> : vector<8xi32>
    %600 = vector.multi_reduction <minsi>, %599, %cst_76 [1] : vector<8x128xi32> to vector<8xi32>
    %601 = vector.shape_cast %600 : vector<8xi32> to vector<8x1xi32>
    %c12_i32 = arith.constant 12 : i32
    %602 = vector.broadcast %601 : vector<8x1xi32> to vector<8x128xi32>
    %603 = arith.cmpi eq, %6, %602 : vector<8x128xi32>
    %604 = arith.extui %603 : vector<8x128xi1> to vector<8x128xi32>
    %605 = arith.sitofp %604 : vector<8x128xi32> to vector<8x128xf32>
    %606 = arith.mulf %1, %605 : vector<8x128xf32>
    %cst_77 = arith.constant dense<0.000000e+00> : vector<8xf32>
    %607 = vector.multi_reduction <add>, %606, %cst_77 [1] : vector<8x128xf32> to vector<8xf32>
    %608 = vector.shape_cast %607 : vector<8xf32> to vector<8x1xf32>
    %609 = arith.mulf %3, %605 : vector<8x128xf32>
    %cst_78 = arith.constant dense<0.000000e+00> : vector<8xf32>
    %610 = vector.multi_reduction <add>, %609, %cst_78 [1] : vector<8x128xf32> to vector<8xf32>
    %611 = vector.shape_cast %610 : vector<8xf32> to vector<8x1xf32>
    %612 = arith.mulf %5, %605 : vector<8x128xf32>
    %cst_79 = arith.constant dense<0.000000e+00> : vector<8xf32>
    %613 = vector.multi_reduction <add>, %612, %cst_79 [1] : vector<8x128xf32> to vector<8xf32>
    %614 = vector.shape_cast %613 : vector<8xf32> to vector<8x1xf32>
    %615 = vector.broadcast %c12_i32 : i32 to vector<1x16xi32>
    %616 = arith.cmpi eq, %7, %615 : vector<1x16xi32>
    %617 = vector.shape_cast %616 : vector<1x16xi1> to vector<1x16xi1>
    %618 = vector.broadcast %617 : vector<1x16xi1> to vector<8x16xi1>
    %619 = vector.shape_cast %608 : vector<8x1xf32> to vector<8x1xf32>
    %620 = vector.broadcast %619 : vector<8x1xf32> to vector<8x16xf32>
    %621 = arith.select %618, %620, %571 : vector<8x16xi1>, vector<8x16xf32>
    %622 = vector.shape_cast %616 : vector<1x16xi1> to vector<1x16xi1>
    %623 = vector.broadcast %622 : vector<1x16xi1> to vector<8x16xi1>
    %624 = vector.shape_cast %611 : vector<8x1xf32> to vector<8x1xf32>
    %625 = vector.broadcast %624 : vector<8x1xf32> to vector<8x16xf32>
    %626 = arith.select %623, %625, %576 : vector<8x16xi1>, vector<8x16xf32>
    %627 = vector.shape_cast %616 : vector<1x16xi1> to vector<1x16xi1>
    %628 = vector.broadcast %627 : vector<1x16xi1> to vector<8x16xi1>
    %629 = vector.shape_cast %614 : vector<8x1xf32> to vector<8x1xf32>
    %630 = vector.broadcast %629 : vector<8x1xf32> to vector<8x16xf32>
    %631 = arith.select %628, %630, %581 : vector<8x16xi1>, vector<8x16xf32>
    %632 = vector.broadcast %608 : vector<8x1xf32> to vector<8x128xf32>
    %633 = arith.subf %1, %632 : vector<8x128xf32>
    %634 = arith.mulf %633, %633 : vector<8x128xf32>
    %635 = vector.broadcast %611 : vector<8x1xf32> to vector<8x128xf32>
    %636 = arith.subf %3, %635 : vector<8x128xf32>
    %637 = arith.mulf %636, %636 : vector<8x128xf32>
    %638 = arith.addf %634, %637 : vector<8x128xf32>
    %639 = vector.broadcast %614 : vector<8x1xf32> to vector<8x128xf32>
    %640 = arith.subf %5, %639 : vector<8x128xf32>
    %641 = arith.mulf %640, %640 : vector<8x128xf32>
    %642 = arith.addf %638, %641 : vector<8x128xf32>
    %643 = arith.minimumf %593, %642 : vector<8x128xf32>
    %cst_80 = arith.constant dense<0xFF800000> : vector<8xf32>
    %644 = vector.multi_reduction <maximumf>, %643, %cst_80 [1] : vector<8x128xf32> to vector<8xf32>
    %645 = vector.shape_cast %644 : vector<8xf32> to vector<8x1xf32>
    %646 = vector.broadcast %645 : vector<8x1xf32> to vector<8x128xf32>
    %647 = arith.cmpf oeq, %643, %646 : vector<8x128xf32>
    %c128_i32_81 = arith.constant 128 : i32
    %648 = vector.broadcast %c128_i32_81 : i32 to vector<8x128xi32>
    %649 = arith.select %647, %6, %648 : vector<8x128xi1>, vector<8x128xi32>
    %cst_82 = arith.constant dense<2147483647> : vector<8xi32>
    %650 = vector.multi_reduction <minsi>, %649, %cst_82 [1] : vector<8x128xi32> to vector<8xi32>
    %651 = vector.shape_cast %650 : vector<8xi32> to vector<8x1xi32>
    %c13_i32 = arith.constant 13 : i32
    %652 = vector.broadcast %651 : vector<8x1xi32> to vector<8x128xi32>
    %653 = arith.cmpi eq, %6, %652 : vector<8x128xi32>
    %654 = arith.extui %653 : vector<8x128xi1> to vector<8x128xi32>
    %655 = arith.sitofp %654 : vector<8x128xi32> to vector<8x128xf32>
    %656 = arith.mulf %1, %655 : vector<8x128xf32>
    %cst_83 = arith.constant dense<0.000000e+00> : vector<8xf32>
    %657 = vector.multi_reduction <add>, %656, %cst_83 [1] : vector<8x128xf32> to vector<8xf32>
    %658 = vector.shape_cast %657 : vector<8xf32> to vector<8x1xf32>
    %659 = arith.mulf %3, %655 : vector<8x128xf32>
    %cst_84 = arith.constant dense<0.000000e+00> : vector<8xf32>
    %660 = vector.multi_reduction <add>, %659, %cst_84 [1] : vector<8x128xf32> to vector<8xf32>
    %661 = vector.shape_cast %660 : vector<8xf32> to vector<8x1xf32>
    %662 = arith.mulf %5, %655 : vector<8x128xf32>
    %cst_85 = arith.constant dense<0.000000e+00> : vector<8xf32>
    %663 = vector.multi_reduction <add>, %662, %cst_85 [1] : vector<8x128xf32> to vector<8xf32>
    %664 = vector.shape_cast %663 : vector<8xf32> to vector<8x1xf32>
    %665 = vector.broadcast %c13_i32 : i32 to vector<1x16xi32>
    %666 = arith.cmpi eq, %7, %665 : vector<1x16xi32>
    %667 = vector.shape_cast %666 : vector<1x16xi1> to vector<1x16xi1>
    %668 = vector.broadcast %667 : vector<1x16xi1> to vector<8x16xi1>
    %669 = vector.shape_cast %658 : vector<8x1xf32> to vector<8x1xf32>
    %670 = vector.broadcast %669 : vector<8x1xf32> to vector<8x16xf32>
    %671 = arith.select %668, %670, %621 : vector<8x16xi1>, vector<8x16xf32>
    %672 = vector.shape_cast %666 : vector<1x16xi1> to vector<1x16xi1>
    %673 = vector.broadcast %672 : vector<1x16xi1> to vector<8x16xi1>
    %674 = vector.shape_cast %661 : vector<8x1xf32> to vector<8x1xf32>
    %675 = vector.broadcast %674 : vector<8x1xf32> to vector<8x16xf32>
    %676 = arith.select %673, %675, %626 : vector<8x16xi1>, vector<8x16xf32>
    %677 = vector.shape_cast %666 : vector<1x16xi1> to vector<1x16xi1>
    %678 = vector.broadcast %677 : vector<1x16xi1> to vector<8x16xi1>
    %679 = vector.shape_cast %664 : vector<8x1xf32> to vector<8x1xf32>
    %680 = vector.broadcast %679 : vector<8x1xf32> to vector<8x16xf32>
    %681 = arith.select %678, %680, %631 : vector<8x16xi1>, vector<8x16xf32>
    %682 = vector.broadcast %658 : vector<8x1xf32> to vector<8x128xf32>
    %683 = arith.subf %1, %682 : vector<8x128xf32>
    %684 = arith.mulf %683, %683 : vector<8x128xf32>
    %685 = vector.broadcast %661 : vector<8x1xf32> to vector<8x128xf32>
    %686 = arith.subf %3, %685 : vector<8x128xf32>
    %687 = arith.mulf %686, %686 : vector<8x128xf32>
    %688 = arith.addf %684, %687 : vector<8x128xf32>
    %689 = vector.broadcast %664 : vector<8x1xf32> to vector<8x128xf32>
    %690 = arith.subf %5, %689 : vector<8x128xf32>
    %691 = arith.mulf %690, %690 : vector<8x128xf32>
    %692 = arith.addf %688, %691 : vector<8x128xf32>
    %693 = arith.minimumf %643, %692 : vector<8x128xf32>
    %cst_86 = arith.constant dense<0xFF800000> : vector<8xf32>
    %694 = vector.multi_reduction <maximumf>, %693, %cst_86 [1] : vector<8x128xf32> to vector<8xf32>
    %695 = vector.shape_cast %694 : vector<8xf32> to vector<8x1xf32>
    %696 = vector.broadcast %695 : vector<8x1xf32> to vector<8x128xf32>
    %697 = arith.cmpf oeq, %693, %696 : vector<8x128xf32>
    %c128_i32_87 = arith.constant 128 : i32
    %698 = vector.broadcast %c128_i32_87 : i32 to vector<8x128xi32>
    %699 = arith.select %697, %6, %698 : vector<8x128xi1>, vector<8x128xi32>
    %cst_88 = arith.constant dense<2147483647> : vector<8xi32>
    %700 = vector.multi_reduction <minsi>, %699, %cst_88 [1] : vector<8x128xi32> to vector<8xi32>
    %701 = vector.shape_cast %700 : vector<8xi32> to vector<8x1xi32>
    %c14_i32 = arith.constant 14 : i32
    %702 = vector.broadcast %701 : vector<8x1xi32> to vector<8x128xi32>
    %703 = arith.cmpi eq, %6, %702 : vector<8x128xi32>
    %704 = arith.extui %703 : vector<8x128xi1> to vector<8x128xi32>
    %705 = arith.sitofp %704 : vector<8x128xi32> to vector<8x128xf32>
    %706 = arith.mulf %1, %705 : vector<8x128xf32>
    %cst_89 = arith.constant dense<0.000000e+00> : vector<8xf32>
    %707 = vector.multi_reduction <add>, %706, %cst_89 [1] : vector<8x128xf32> to vector<8xf32>
    %708 = vector.shape_cast %707 : vector<8xf32> to vector<8x1xf32>
    %709 = arith.mulf %3, %705 : vector<8x128xf32>
    %cst_90 = arith.constant dense<0.000000e+00> : vector<8xf32>
    %710 = vector.multi_reduction <add>, %709, %cst_90 [1] : vector<8x128xf32> to vector<8xf32>
    %711 = vector.shape_cast %710 : vector<8xf32> to vector<8x1xf32>
    %712 = arith.mulf %5, %705 : vector<8x128xf32>
    %cst_91 = arith.constant dense<0.000000e+00> : vector<8xf32>
    %713 = vector.multi_reduction <add>, %712, %cst_91 [1] : vector<8x128xf32> to vector<8xf32>
    %714 = vector.shape_cast %713 : vector<8xf32> to vector<8x1xf32>
    %715 = vector.broadcast %c14_i32 : i32 to vector<1x16xi32>
    %716 = arith.cmpi eq, %7, %715 : vector<1x16xi32>
    %717 = vector.shape_cast %716 : vector<1x16xi1> to vector<1x16xi1>
    %718 = vector.broadcast %717 : vector<1x16xi1> to vector<8x16xi1>
    %719 = vector.shape_cast %708 : vector<8x1xf32> to vector<8x1xf32>
    %720 = vector.broadcast %719 : vector<8x1xf32> to vector<8x16xf32>
    %721 = arith.select %718, %720, %671 : vector<8x16xi1>, vector<8x16xf32>
    %722 = vector.shape_cast %716 : vector<1x16xi1> to vector<1x16xi1>
    %723 = vector.broadcast %722 : vector<1x16xi1> to vector<8x16xi1>
    %724 = vector.shape_cast %711 : vector<8x1xf32> to vector<8x1xf32>
    %725 = vector.broadcast %724 : vector<8x1xf32> to vector<8x16xf32>
    %726 = arith.select %723, %725, %676 : vector<8x16xi1>, vector<8x16xf32>
    %727 = vector.shape_cast %716 : vector<1x16xi1> to vector<1x16xi1>
    %728 = vector.broadcast %727 : vector<1x16xi1> to vector<8x16xi1>
    %729 = vector.shape_cast %714 : vector<8x1xf32> to vector<8x1xf32>
    %730 = vector.broadcast %729 : vector<8x1xf32> to vector<8x16xf32>
    %731 = arith.select %728, %730, %681 : vector<8x16xi1>, vector<8x16xf32>
    %732 = vector.broadcast %708 : vector<8x1xf32> to vector<8x128xf32>
    %733 = arith.subf %1, %732 : vector<8x128xf32>
    %734 = arith.mulf %733, %733 : vector<8x128xf32>
    %735 = vector.broadcast %711 : vector<8x1xf32> to vector<8x128xf32>
    %736 = arith.subf %3, %735 : vector<8x128xf32>
    %737 = arith.mulf %736, %736 : vector<8x128xf32>
    %738 = arith.addf %734, %737 : vector<8x128xf32>
    %739 = vector.broadcast %714 : vector<8x1xf32> to vector<8x128xf32>
    %740 = arith.subf %5, %739 : vector<8x128xf32>
    %741 = arith.mulf %740, %740 : vector<8x128xf32>
    %742 = arith.addf %738, %741 : vector<8x128xf32>
    %743 = arith.minimumf %693, %742 : vector<8x128xf32>
    %cst_92 = arith.constant dense<0xFF800000> : vector<8xf32>
    %744 = vector.multi_reduction <maximumf>, %743, %cst_92 [1] : vector<8x128xf32> to vector<8xf32>
    %745 = vector.shape_cast %744 : vector<8xf32> to vector<8x1xf32>
    %746 = vector.broadcast %745 : vector<8x1xf32> to vector<8x128xf32>
    %747 = arith.cmpf oeq, %743, %746 : vector<8x128xf32>
    %c128_i32_93 = arith.constant 128 : i32
    %748 = vector.broadcast %c128_i32_93 : i32 to vector<8x128xi32>
    %749 = arith.select %747, %6, %748 : vector<8x128xi1>, vector<8x128xi32>
    %cst_94 = arith.constant dense<2147483647> : vector<8xi32>
    %750 = vector.multi_reduction <minsi>, %749, %cst_94 [1] : vector<8x128xi32> to vector<8xi32>
    %751 = vector.shape_cast %750 : vector<8xi32> to vector<8x1xi32>
    %c15_i32 = arith.constant 15 : i32
    %752 = vector.broadcast %751 : vector<8x1xi32> to vector<8x128xi32>
    %753 = arith.cmpi eq, %6, %752 : vector<8x128xi32>
    %754 = arith.extui %753 : vector<8x128xi1> to vector<8x128xi32>
    %755 = arith.sitofp %754 : vector<8x128xi32> to vector<8x128xf32>
    %756 = arith.mulf %1, %755 : vector<8x128xf32>
    %cst_95 = arith.constant dense<0.000000e+00> : vector<8xf32>
    %757 = vector.multi_reduction <add>, %756, %cst_95 [1] : vector<8x128xf32> to vector<8xf32>
    %758 = vector.shape_cast %757 : vector<8xf32> to vector<8x1xf32>
    %759 = arith.mulf %3, %755 : vector<8x128xf32>
    %cst_96 = arith.constant dense<0.000000e+00> : vector<8xf32>
    %760 = vector.multi_reduction <add>, %759, %cst_96 [1] : vector<8x128xf32> to vector<8xf32>
    %761 = vector.shape_cast %760 : vector<8xf32> to vector<8x1xf32>
    %762 = arith.mulf %5, %755 : vector<8x128xf32>
    %cst_97 = arith.constant dense<0.000000e+00> : vector<8xf32>
    %763 = vector.multi_reduction <add>, %762, %cst_97 [1] : vector<8x128xf32> to vector<8xf32>
    %764 = vector.shape_cast %763 : vector<8xf32> to vector<8x1xf32>
    %765 = vector.broadcast %c15_i32 : i32 to vector<1x16xi32>
    %766 = arith.cmpi eq, %7, %765 : vector<1x16xi32>
    %767 = vector.shape_cast %766 : vector<1x16xi1> to vector<1x16xi1>
    %768 = vector.broadcast %767 : vector<1x16xi1> to vector<8x16xi1>
    %769 = vector.shape_cast %758 : vector<8x1xf32> to vector<8x1xf32>
    %770 = vector.broadcast %769 : vector<8x1xf32> to vector<8x16xf32>
    %771 = arith.select %768, %770, %721 : vector<8x16xi1>, vector<8x16xf32>
    %772 = vector.shape_cast %766 : vector<1x16xi1> to vector<1x16xi1>
    %773 = vector.broadcast %772 : vector<1x16xi1> to vector<8x16xi1>
    %774 = vector.shape_cast %761 : vector<8x1xf32> to vector<8x1xf32>
    %775 = vector.broadcast %774 : vector<8x1xf32> to vector<8x16xf32>
    %776 = arith.select %773, %775, %726 : vector<8x16xi1>, vector<8x16xf32>
    %777 = vector.shape_cast %766 : vector<1x16xi1> to vector<1x16xi1>
    %778 = vector.broadcast %777 : vector<1x16xi1> to vector<8x16xi1>
    %779 = vector.shape_cast %764 : vector<8x1xf32> to vector<8x1xf32>
    %780 = vector.broadcast %779 : vector<8x1xf32> to vector<8x16xf32>
    %781 = arith.select %778, %780, %731 : vector<8x16xi1>, vector<8x16xf32>
    %782 = vector.broadcast %758 : vector<8x1xf32> to vector<8x128xf32>
    %783 = arith.subf %1, %782 : vector<8x128xf32>
    %784 = arith.mulf %783, %783 : vector<8x128xf32>
    %785 = vector.broadcast %761 : vector<8x1xf32> to vector<8x128xf32>
    %786 = arith.subf %3, %785 : vector<8x128xf32>
    %787 = arith.mulf %786, %786 : vector<8x128xf32>
    %788 = arith.addf %784, %787 : vector<8x128xf32>
    %789 = vector.broadcast %764 : vector<8x1xf32> to vector<8x128xf32>
    %790 = arith.subf %5, %789 : vector<8x128xf32>
    %791 = arith.mulf %790, %790 : vector<8x128xf32>
    %792 = arith.addf %788, %791 : vector<8x128xf32>
    %793 = arith.minimumf %743, %792 : vector<8x128xf32>
    %cst_98 = arith.constant dense<0xFF800000> : vector<8xf32>
    %794 = vector.multi_reduction <maximumf>, %793, %cst_98 [1] : vector<8x128xf32> to vector<8xf32>
    %795 = vector.shape_cast %794 : vector<8xf32> to vector<8x1xf32>
    %796 = vector.broadcast %795 : vector<8x1xf32> to vector<8x128xf32>
    %797 = arith.cmpf oeq, %793, %796 : vector<8x128xf32>
    %c128_i32_99 = arith.constant 128 : i32
    %798 = vector.broadcast %c128_i32_99 : i32 to vector<8x128xi32>
    %799 = arith.select %797, %6, %798 : vector<8x128xi1>, vector<8x128xi32>
    %cst_100 = arith.constant dense<2147483647> : vector<8xi32>
    %800 = vector.multi_reduction <minsi>, %799, %cst_100 [1] : vector<8x128xi32> to vector<8xi32>
    %801 = vector.shape_cast %800 : vector<8xi32> to vector<8x1xi32>
    %c15_i32_101 = arith.constant 15 : i32
    %c0_102 = arith.constant 0 : index
    %c0_103 = arith.constant 0 : index
    %c0_104 = arith.constant 0 : index
    %802 = vector.load %arg2[%c0_102, %c0_103, %c0_104] : memref<3x8x16xf32, #tpu.memory_space<vmem>>, vector<1x8x16xf32>
    %803 = vector.shape_cast %802 : vector<1x8x16xf32> to vector<8x16xf32>
    %804 = vector.shape_cast %771 : vector<8x16xf32> to vector<1x8x16xf32>
    tpu.vector_store %arg2[%c0_102, %c0_103, %c0_104], %804 {strides = array<i32>} : memref<3x8x16xf32, #tpu.memory_space<vmem>>, vector<1x8x16xf32>,
    %c1_105 = arith.constant 1 : index
    %c0_106 = arith.constant 0 : index
    %c0_107 = arith.constant 0 : index
    %805 = vector.load %arg2[%c1_105, %c0_106, %c0_107] : memref<3x8x16xf32, #tpu.memory_space<vmem>>, vector<1x8x16xf32>
    %806 = vector.shape_cast %805 : vector<1x8x16xf32> to vector<8x16xf32>
    %807 = vector.shape_cast %776 : vector<8x16xf32> to vector<1x8x16xf32>
    tpu.vector_store %arg2[%c1_105, %c0_106, %c0_107], %807 {strides = array<i32>} : memref<3x8x16xf32, #tpu.memory_space<vmem>>, vector<1x8x16xf32>,
    %c2_108 = arith.constant 2 : index
    %c0_109 = arith.constant 0 : index
    %c0_110 = arith.constant 0 : index
    %808 = vector.load %arg2[%c2_108, %c0_109, %c0_110] : memref<3x8x16xf32, #tpu.memory_space<vmem>>, vector<1x8x16xf32>
    %809 = vector.shape_cast %808 : vector<1x8x16xf32> to vector<8x16xf32>
    %810 = vector.shape_cast %781 : vector<8x16xf32> to vector<1x8x16xf32>
    tpu.vector_store %arg2[%c2_108, %c0_109, %c0_110], %810 {strides = array<i32>} : memref<3x8x16xf32, #tpu.memory_space<vmem>>, vector<1x8x16xf32>,
    return
  }
  func.func @transform_0(%arg0: i32) -> (i32, i32, i32) {
    %c0_i32 = arith.constant 0 : i32
    %c0_i32_0 = arith.constant 0 : i32
    %c0_i32_1 = arith.constant 0 : i32
    return %c0_i32, %arg0, %c0_i32_0 : i32, i32, i32
  }
  func.func @transform_1(%arg0: i32) -> (i32, i32, i32) {
    %c0_i32 = arith.constant 0 : i32
    %c0_i32_0 = arith.constant 0 : i32
    %c0_i32_1 = arith.constant 0 : i32
    return %c0_i32, %arg0, %c0_i32_0 : i32, i32, i32
  }
}

</mosaic_0001>

<llo_original>
// kernel: fps_sampler_forward.1
$region0: #{fps_sampler_forward.1}
  #allocation0 [shape = 'u32[]', space=smem, size = 0x4, offset = 0x4, fixed_abs, tag = 'smem constant byte address 0x4 - core index']
  #allocation1 [shape = 'u32[144,128]{1,0:T(1,128)}', space=vmem, size = 0x12000, scoped, tag = 'internal scratch']
  #allocation6 [shape = 's32[]', space=sflag, size = 0x4, offset = 0, fixed_abs, tag = 'sflag constant byte address 0x0 - dummy sync flag']
  #allocation8 [shape = 's32[]', space=sflag, size = 0x4, offset = 0, fixed_abs, tag = 'sflag constant byte address 0x0 - dummy sync flag']
  %s0 = inlined_call_operand.hbm [shape: f32[3,2,128], index: 0, kind: input, shape index: {}]
  %s1 = inlined_call_operand.hbm [shape: f32[3,2,16], index: 1, kind: output, shape index: {}]
  %s2 = sld [smem:[#allocation0]]
  $region18: #{fps_sampler_forward.1} parent=0
    _
  %s4 = ssub.s32 1, %s2
  %s5 = scalar_select 0, %s4, %s2
  $region1: #{fps_sampler_forward.1} parent=0
    #allocation2 [shape = 'u8[12288]{0}', space=vmem, size = 0x3000, scoped, tag = 'input window, operand 0, single buffered']
    #allocation3 [shape = 's32[1]{0}', space=sflag, size = 0x4, scoped, tag = 'scoped memory for fps_sampler_forward.1']
    #allocation4 [shape = 's32[1]{0}', space=sflag, size = 0x4, scoped, tag = 'scoped memory for fps_sampler_forward.1']
    #allocation5 [shape = 'u8[12288]{0}', space=vmem, size = 0x3000, scoped, tag = 'output window, operand 0, single buffered']
    %6 = vsyncpa [#allocation3], 0
    %7 = vsyncpa [#allocation4], 0
    // Predicated region
    $region2: #{fps_sampler_forward.1} parent=1 // pred_check
      _
    $region3: #{fps_sampler_forward.1} parent=1 // pred_check_branch
      %9 = sbr.rel (0) target = $region5
    $region4: #{fps_sampler_forward.1} parent=1 // pred_region
      #allocation7 [shape = 'u32[6]{0}', space=smem, size = 0x18, scoped, tag = 'DMA stride descriptor']
      %s11 = ssub.s32 384, 96
      %12 = vsyncadd [#allocation3], %s11
      %s14 = sshll.u32 1, 14
      %s15 = sxor.u32 4294967295, %s14
      %s17 = sld [smem:[#allocation0]]
      %s18 = sadd.s32 2, %s17
      %s20 = sshll.u32 7, 26
      %s21 = sxor.u32 4294967295, %s20
      %s22 = sand.u32 0, %s21
      %s23 = sshll.u32 %s18, 26
      %s24 = sor.u32 %s22, %s23
      %s25 = sshll.u32 [#allocation2], 4
      %s26 = int_to_ptr.vmem [resolvable:$true] %s25
      %32 = sst [smem:[#allocation7]] 32
      %s33 = scalar_lea.smem [#allocation7], 1
      %34 = sst [smem:[%s33]] 128
      %s35 = scalar_lea.smem [#allocation7], 2
      %36 = sst [smem:[%s35]] 1
      %s37 = scalar_lea.smem [#allocation7], 3
      %38 = sst [smem:[%s37]] 32
      %s39 = scalar_lea.smem [#allocation7], 4
      %40 = sst [smem:[%s39]] 32
      %s41 = scalar_lea.smem [#allocation7], 5
      %42 = sst [smem:[%s41]] 2
      %44 = dma.general %s0, 96, %s26, [#allocation3], [#allocation6], [#allocation7], %s24, 0
    $region5: #{fps_sampler_forward.1} parent=1 // pred_fallthru
      _
    // Predicated region
    $region6: #{fps_sampler_forward.1} parent=1 // pred_check
      _
    $region7: #{fps_sampler_forward.1} parent=1 // pred_check_branch
      %46 = sbr.rel (0) target = $region9
    $region8: #{fps_sampler_forward.1} parent=1 // pred_region
      %47 = dma.done [#allocation3], 384
    $region9: #{fps_sampler_forward.1} parent=1 // pred_fallthru
      _
    %v48 = vld [vmem:[#allocation2] sm:$0xff]
    %s49 = scalar_lea.vmem [#allocation2], 8
    %v50 = vld [vmem:[%s49] sm:$0xff]
    %s51 = scalar_lea.vmem [#allocation2], 16
    %v52 = vld [vmem:[%s51] sm:$0xff]
    %v53 = vlaneseq
    %v54 = vand.u32 %v53, 127
    %vm55 = vcmp.eq.s32.totalorder %v54, 0
    %v56 = vsel %vm55, 1, 0
    %vm57 = vcmp.eq.s32.totalorder %v56, 1
    %59 = vset.pattern.permute.xlu0 0
    %60 = vperm.xlu0 %59, %v48
    %v61 = vpop.permute.xlu0 %60
    %v63 = vsel %vm57, %v61, 0.0
    %65 = vset.pattern.permute.xlu0 0
    %66 = vperm.xlu0 %65, %v50
    %v67 = vpop.permute.xlu0 %66
    %v69 = vsel %vm57, %v67, 0.0
    %71 = vset.pattern.permute.xlu0 0
    %72 = vperm.xlu0 %71, %v52
    %v73 = vpop.permute.xlu0 %72
    %v75 = vsel %vm57, %v73, 0.0
    %v76 = vsub.f32 %v48, %v61
    %v77 = vmul.f32 %v76, %v76
    %v78 = vsub.f32 %v50, %v67
    %v79 = vmul.f32 %v78, %v78
    %v80 = vadd.f32 %v77, %v79
    %v81 = vsub.f32 %v52, %v73
    %v82 = vmul.f32 %v81, %v81
    %v83 = vadd.f32 %v80, %v82
    %v84 = vmin.f32 %v83, 1e+10
    %85 = vmax.xlane.f32.xlu0 %v84
    %v86 = vpop.xlane.xlu0 %85
    %vm87 = vcmp.eq.f32.partialorder %v84, %v86
    %v88 = vsel %vm87, %v54, 128
    %v89 = vand.u32 %v88, 65535
    %v90 = vshra.s32 %v88, 16
    %v91 = vcvt.s32.f32 %v89
    %v92 = vcvt.s32.f32 %v90
    %93 = vmin.xlane.f32.xlu0 %v92
    %v94 = vpop.xlane.xlu0 %93
    %vm95 = vcmp.eq.f32.partialorder %v92, %v94
    %v96 = vsel %vm95, %v91, inf
    %97 = vmin.xlane.f32.xlu0 %v96
    %v98 = vpop.xlane.xlu0 %97
    %v99 = vcvt.f32.s32 %v98
    %v100 = vcvt.f32.s32 %v94
    %v101 = vshll.u32 %v100, 16
    %v102 = vadd.s32 %v101, %v99
    %vm103 = vcmp.eq.s32.totalorder %v54, %v102
    %v104 = vsel %vm103, 1, 0
    %v105 = vcvt.s32.f32 %v104
    %v106 = vmul.f32 %v48, %v105
    %107 = vadd.xlane.f32.xlu0 %v106
    %v108 = vpop.xlane.xlu0 %107
    %v109 = vmul.f32 %v50, %v105
    %110 = vadd.xlane.f32.xlu0 %v109
    %v111 = vpop.xlane.xlu0 %110
    %v112 = vmul.f32 %v52, %v105
    %113 = vadd.xlane.f32.xlu0 %v112
    %v114 = vpop.xlane.xlu0 %113
    %vm115 = vcmp.eq.s32.totalorder %v54, 1
    %v116 = vsel %vm115, 1, 0
    %vm117 = vcmp.eq.s32.totalorder %v116, 1
    %v118 = vsel %vm117, %v108, %v63
    %v119 = vsel %vm117, %v111, %v69
    %v120 = vsel %vm117, %v114, %v75
    %v121 = vsub.f32 %v48, %v108
    %v122 = vmul.f32 %v121, %v121
    %v123 = vsub.f32 %v50, %v111
    %v124 = vmul.f32 %v123, %v123
    %v125 = vadd.f32 %v122, %v124
    %v126 = vsub.f32 %v52, %v114
    %v127 = vmul.f32 %v126, %v126
    %v128 = vadd.f32 %v125, %v127
    %v129 = vmin.f32 %v84, %v128
    %130 = vmax.xlane.f32.xlu0 %v129
    %v131 = vpop.xlane.xlu0 %130
    %vm132 = vcmp.eq.f32.partialorder %v129, %v131
    %v133 = vsel %vm132, %v54, 128
    %v134 = vand.u32 %v133, 65535
    %v135 = vshra.s32 %v133, 16
    %v136 = vcvt.s32.f32 %v134
    %v137 = vcvt.s32.f32 %v135
    %138 = vmin.xlane.f32.xlu0 %v137
    %v139 = vpop.xlane.xlu0 %138
    %vm140 = vcmp.eq.f32.partialorder %v137, %v139
    %v141 = vsel %vm140, %v136, inf
    %142 = vmin.xlane.f32.xlu0 %v141
    %v143 = vpop.xlane.xlu0 %142
    %v144 = vcvt.f32.s32 %v143
    %v145 = vcvt.f32.s32 %v139
    %v146 = vshll.u32 %v145, 16
    %v147 = vadd.s32 %v146, %v144
    %vm148 = vcmp.eq.s32.totalorder %v54, %v147
    %v149 = vsel %vm148, 1, 0
    %v150 = vcvt.s32.f32 %v149
    %v151 = vmul.f32 %v48, %v150
    %152 = vadd.xlane.f32.xlu0 %v151
    %v153 = vpop.xlane.xlu0 %152
    %v154 = vmul.f32 %v50, %v150
    %155 = vadd.xlane.f32.xlu0 %v154
    %v156 = vpop.xlane.xlu0 %155
    %v157 = vmul.f32 %v52, %v150
    %158 = vadd.xlane.f32.xlu0 %v157
    %v159 = vpop.xlane.xlu0 %158
    %vm160 = vcmp.eq.s32.totalorder %v54, 2
    %v161 = vsel %vm160, 1, 0
    %vm162 = vcmp.eq.s32.totalorder %v161, 1
    %v163 = vsel %vm162, %v153, %v118
    %v164 = vsel %vm162, %v156, %v119
    %v165 = vsel %vm162, %v159, %v120
    %v166 = vsub.f32 %v48, %v153
    %v167 = vmul.f32 %v166, %v166
    %v168 = vsub.f32 %v50, %v156
    %v169 = vmul.f32 %v168, %v168
    %v170 = vadd.f32 %v167, %v169
    %v171 = vsub.f32 %v52, %v159
    %v172 = vmul.f32 %v171, %v171
    %v173 = vadd.f32 %v170, %v172
    %v174 = vmin.f32 %v129, %v173
    %175 = vmax.xlane.f32.xlu0 %v174
    %v176 = vpop.xlane.xlu0 %175
    %vm177 = vcmp.eq.f32.partialorder %v174, %v176
    %v178 = vsel %vm177, %v54, 128
    %v179 = vand.u32 %v178, 65535
    %v180 = vshra.s32 %v178, 16
    %v181 = vcvt.s32.f32 %v179
    %v182 = vcvt.s32.f32 %v180
    %183 = vmin.xlane.f32.xlu0 %v182
    %v184 = vpop.xlane.xlu0 %183
    %vm185 = vcmp.eq.f32.partialorder %v182, %v184
    %v186 = vsel %vm185, %v181, inf
    %187 = vmin.xlane.f32.xlu0 %v186
    %v188 = vpop.xlane.xlu0 %187
    %v189 = vcvt.f32.s32 %v188
    %v190 = vcvt.f32.s32 %v184
    %v191 = vshll.u32 %v190, 16
    %v192 = vadd.s32 %v191, %v189
    %vm193 = vcmp.eq.s32.totalorder %v54, %v192
    %v194 = vsel %vm193, 1, 0
    %v195 = vcvt.s32.f32 %v194
    %v196 = vmul.f32 %v48, %v195
    %197 = vadd.xlane.f32.xlu0 %v196
    %v198 = vpop.xlane.xlu0 %197
    %v199 = vmul.f32 %v50, %v195
    %200 = vadd.xlane.f32.xlu0 %v199
    %v201 = vpop.xlane.xlu0 %200
    %v202 = vmul.f32 %v52, %v195
    %203 = vadd.xlane.f32.xlu0 %v202
    %v204 = vpop.xlane.xlu0 %203
    %vm205 = vcmp.eq.s32.totalorder %v54, 3
    %v206 = vsel %vm205, 1, 0
    %vm207 = vcmp.eq.s32.totalorder %v206, 1
    %v208 = vsel %vm207, %v198, %v163
    %v209 = vsel %vm207, %v201, %v164
    %v210 = vsel %vm207, %v204, %v165
    %v211 = vsub.f32 %v48, %v198
    %v212 = vmul.f32 %v211, %v211
    %v213 = vsub.f32 %v50, %v201
    %v214 = vmul.f32 %v213, %v213
    %v215 = vadd.f32 %v212, %v214
    %v216 = vsub.f32 %v52, %v204
    %v217 = vmul.f32 %v216, %v216
    %v218 = vadd.f32 %v215, %v217
    %v219 = vmin.f32 %v174, %v218
    %220 = vmax.xlane.f32.xlu0 %v219
    %v221 = vpop.xlane.xlu0 %220
    %vm222 = vcmp.eq.f32.partialorder %v219, %v221
    %v223 = vsel %vm222, %v54, 128
    %v224 = vand.u32 %v223, 65535
    %v225 = vshra.s32 %v223, 16
    %v226 = vcvt.s32.f32 %v224
    %v227 = vcvt.s32.f32 %v225
    %228 = vmin.xlane.f32.xlu0 %v227
    %v229 = vpop.xlane.xlu0 %228
    %vm230 = vcmp.eq.f32.partialorder %v227, %v229
    %v231 = vsel %vm230, %v226, inf
    %232 = vmin.xlane.f32.xlu0 %v231
    %v233 = vpop.xlane.xlu0 %232
    %v234 = vcvt.f32.s32 %v233
    %v235 = vcvt.f32.s32 %v229
    %v236 = vshll.u32 %v235, 16
    %v237 = vadd.s32 %v236, %v234
    %vm238 = vcmp.eq.s32.totalorder %v54, %v237
    %v239 = vsel %vm238, 1, 0
    %v240 = vcvt.s32.f32 %v239
    %v241 = vmul.f32 %v48, %v240
    %242 = vadd.xlane.f32.xlu0 %v241
    %v243 = vpop.xlane.xlu0 %242
    %v244 = vmul.f32 %v50, %v240
    %245 = vadd.xlane.f32.xlu0 %v244
    %v246 = vpop.xlane.xlu0 %245
    %v247 = vmul.f32 %v52, %v240
    %248 = vadd.xlane.f32.xlu0 %v247
    %v249 = vpop.xlane.xlu0 %248
    %vm250 = vcmp.eq.s32.totalorder %v54, 4
    %v251 = vsel %vm250, 1, 0
    %vm252 = vcmp.eq.s32.totalorder %v251, 1
    %v253 = vsel %vm252, %v243, %v208
    %v254 = vsel %vm252, %v246, %v209
    %v255 = vsel %vm252, %v249, %v210
    %v256 = vsub.f32 %v48, %v243
    %v257 = vmul.f32 %v256, %v256
    %v258 = vsub.f32 %v50, %v246
    %v259 = vmul.f32 %v258, %v258
    %v260 = vadd.f32 %v257, %v259
    %v261 = vsub.f32 %v52, %v249
    %v262 = vmul.f32 %v261, %v261
    %v263 = vadd.f32 %v260, %v262
    %v264 = vmin.f32 %v219, %v263
    %265 = vmax.xlane.f32.xlu0 %v264
    %v266 = vpop.xlane.xlu0 %265
    %vm267 = vcmp.eq.f32.partialorder %v264, %v266
    %v268 = vsel %vm267, %v54, 128
    %v269 = vand.u32 %v268, 65535
    %v270 = vshra.s32 %v268, 16
    %v271 = vcvt.s32.f32 %v269
    %v272 = vcvt.s32.f32 %v270
    %273 = vmin.xlane.f32.xlu0 %v272
    %v274 = vpop.xlane.xlu0 %273
    %vm275 = vcmp.eq.f32.partialorder %v272, %v274
    %v276 = vsel %vm275, %v271, inf
    %277 = vmin.xlane.f32.xlu0 %v276
    %v278 = vpop.xlane.xlu0 %277
    %v279 = vcvt.f32.s32 %v278
    %v280 = vcvt.f32.s32 %v274
    %v281 = vshll.u32 %v280, 16
    %v282 = vadd.s32 %v281, %v279
    %vm283 = vcmp.eq.s32.totalorder %v54, %v282
    %v284 = vsel %vm283, 1, 0
    %v285 = vcvt.s32.f32 %v284
    %v286 = vmul.f32 %v48, %v285
    %287 = vadd.xlane.f32.xlu0 %v286
    %v288 = vpop.xlane.xlu0 %287
    %v289 = vmul.f32 %v50, %v285
    %290 = vadd.xlane.f32.xlu0 %v289
    %v291 = vpop.xlane.xlu0 %290
    %v292 = vmul.f32 %v52, %v285
    %293 = vadd.xlane.f32.xlu0 %v292
    %v294 = vpop.xlane.xlu0 %293
    %vm295 = vcmp.eq.s32.totalorder %v54, 5
    %v296 = vsel %vm295, 1, 0
    %vm297 = vcmp.eq.s32.totalorder %v296, 1
    %v298 = vsel %vm297, %v288, %v253
    %v299 = vsel %vm297, %v291, %v254
    %v300 = vsel %vm297, %v294, %v255
    %v301 = vsub.f32 %v48, %v288
    %v302 = vmul.f32 %v301, %v301
    %v303 = vsub.f32 %v50, %v291
    %v304 = vmul.f32 %v303, %v303
    %v305 = vadd.f32 %v302, %v304
    %v306 = vsub.f32 %v52, %v294
    %v307 = vmul.f32 %v306, %v306
    %v308 = vadd.f32 %v305, %v307
    %v309 = vmin.f32 %v264, %v308
    %310 = vmax.xlane.f32.xlu0 %v309
    %v311 = vpop.xlane.xlu0 %310
    %vm312 = vcmp.eq.f32.partialorder %v309, %v311
    %v313 = vsel %vm312, %v54, 128
    %v314 = vand.u32 %v313, 65535
    %v315 = vshra.s32 %v313, 16
    %v316 = vcvt.s32.f32 %v314
    %v317 = vcvt.s32.f32 %v315
    %318 = vmin.xlane.f32.xlu0 %v317
    %v319 = vpop.xlane.xlu0 %318
    %vm320 = vcmp.eq.f32.partialorder %v317, %v319
    %v321 = vsel %vm320, %v316, inf
    %322 = vmin.xlane.f32.xlu0 %v321
    %v323 = vpop.xlane.xlu0 %322
    %v324 = vcvt.f32.s32 %v323
    %v325 = vcvt.f32.s32 %v319
    %v326 = vshll.u32 %v325, 16
    %v327 = vadd.s32 %v326, %v324
    %vm328 = vcmp.eq.s32.totalorder %v54, %v327
    %v329 = vsel %vm328, 1, 0
    %v330 = vcvt.s32.f32 %v329
    %v331 = vmul.f32 %v48, %v330
    %332 = vadd.xlane.f32.xlu0 %v331
    %v333 = vpop.xlane.xlu0 %332
    %v334 = vmul.f32 %v50, %v330
    %335 = vadd.xlane.f32.xlu0 %v334
    %v336 = vpop.xlane.xlu0 %335
    %v337 = vmul.f32 %v52, %v330
    %338 = vadd.xlane.f32.xlu0 %v337
    %v339 = vpop.xlane.xlu0 %338
    %vm340 = vcmp.eq.s32.totalorder %v54, 6
    %v341 = vsel %vm340, 1, 0
    %vm342 = vcmp.eq.s32.totalorder %v341, 1
    %v343 = vsel %vm342, %v333, %v298
    %v344 = vsel %vm342, %v336, %v299
    %v345 = vsel %vm342, %v339, %v300
    %v346 = vsub.f32 %v48, %v333
    %v347 = vmul.f32 %v346, %v346
    %v348 = vsub.f32 %v50, %v336
    %v349 = vmul.f32 %v348, %v348
    %v350 = vadd.f32 %v347, %v349
    %v351 = vsub.f32 %v52, %v339
    %v352 = vmul.f32 %v351, %v351
    %v353 = vadd.f32 %v350, %v352
    %v354 = vmin.f32 %v309, %v353
    %355 = vmax.xlane.f32.xlu0 %v354
    %v356 = vpop.xlane.xlu0 %355
    %vm357 = vcmp.eq.f32.partialorder %v354, %v356
    %v358 = vsel %vm357, %v54, 128
    %v359 = vand.u32 %v358, 65535
    %v360 = vshra.s32 %v358, 16
    %v361 = vcvt.s32.f32 %v359
    %v362 = vcvt.s32.f32 %v360
    %363 = vmin.xlane.f32.xlu0 %v362
    %v364 = vpop.xlane.xlu0 %363
    %vm365 = vcmp.eq.f32.partialorder %v362, %v364
    %v366 = vsel %vm365, %v361, inf
    %367 = vmin.xlane.f32.xlu0 %v366
    %v368 = vpop.xlane.xlu0 %367
    %v369 = vcvt.f32.s32 %v368
    %v370 = vcvt.f32.s32 %v364
    %v371 = vshll.u32 %v370, 16
    %v372 = vadd.s32 %v371, %v369
    %vm373 = vcmp.eq.s32.totalorder %v54, %v372
    %v374 = vsel %vm373, 1, 0
    %v375 = vcvt.s32.f32 %v374
    %v376 = vmul.f32 %v48, %v375
    %377 = vadd.xlane.f32.xlu0 %v376
    %v378 = vpop.xlane.xlu0 %377
    %v379 = vmul.f32 %v50, %v375
    %380 = vadd.xlane.f32.xlu0 %v379
    %v381 = vpop.xlane.xlu0 %380
    %v382 = vmul.f32 %v52, %v375
    %383 = vadd.xlane.f32.xlu0 %v382
    %v384 = vpop.xlane.xlu0 %383
    %vm385 = vcmp.eq.s32.totalorder %v54, 7
    %v386 = vsel %vm385, 1, 0
    %vm387 = vcmp.eq.s32.totalorder %v386, 1
    %v388 = vsel %vm387, %v378, %v343
    %v389 = vsel %vm387, %v381, %v344
    %v390 = vsel %vm387, %v384, %v345
    %v391 = vsub.f32 %v48, %v378
    %v392 = vmul.f32 %v391, %v391
    %v393 = vsub.f32 %v50, %v381
    %v394 = vmul.f32 %v393, %v393
    %v395 = vadd.f32 %v392, %v394
    %v396 = vsub.f32 %v52, %v384
    %v397 = vmul.f32 %v396, %v396
    %v398 = vadd.f32 %v395, %v397
    %v399 = vmin.f32 %v354, %v398
    %400 = vmax.xlane.f32.xlu0 %v399
    %v401 = vpop.xlane.xlu0 %400
    %vm402 = vcmp.eq.f32.partialorder %v399, %v401
    %v403 = vsel %vm402, %v54, 128
    %v404 = vand.u32 %v403, 65535
    %v405 = vshra.s32 %v403, 16
    %v406 = vcvt.s32.f32 %v404
    %v407 = vcvt.s32.f32 %v405
    %408 = vmin.xlane.f32.xlu0 %v407
    %v409 = vpop.xlane.xlu0 %408
    %vm410 = vcmp.eq.f32.partialorder %v407, %v409
    %v411 = vsel %vm410, %v406, inf
    %412 = vmin.xlane.f32.xlu0 %v411
    %v413 = vpop.xlane.xlu0 %412
    %v414 = vcvt.f32.s32 %v413
    %v415 = vcvt.f32.s32 %v409
    %v416 = vshll.u32 %v415, 16
    %v417 = vadd.s32 %v416, %v414
    %vm418 = vcmp.eq.s32.totalorder %v54, %v417
    %v419 = vsel %vm418, 1, 0
    %v420 = vcvt.s32.f32 %v419
    %v421 = vmul.f32 %v48, %v420
    %422 = vadd.xlane.f32.xlu0 %v421
    %v423 = vpop.xlane.xlu0 %422
    %v424 = vmul.f32 %v50, %v420
    %425 = vadd.xlane.f32.xlu0 %v424
    %v426 = vpop.xlane.xlu0 %425
    %v427 = vmul.f32 %v52, %v420
    %428 = vadd.xlane.f32.xlu0 %v427
    %v429 = vpop.xlane.xlu0 %428
    %vm430 = vcmp.eq.s32.totalorder %v54, 8
    %v431 = vsel %vm430, 1, 0
    %vm432 = vcmp.eq.s32.totalorder %v431, 1
    %v433 = vsel %vm432, %v423, %v388
    %v434 = vsel %vm432, %v426, %v389
    %v435 = vsel %vm432, %v429, %v390
    %v436 = vsub.f32 %v48, %v423
    %v437 = vmul.f32 %v436, %v436
    %v438 = vsub.f32 %v50, %v426
    %v439 = vmul.f32 %v438, %v438
    %v440 = vadd.f32 %v437, %v439
    %v441 = vsub.f32 %v52, %v429
    %v442 = vmul.f32 %v441, %v441
    %v443 = vadd.f32 %v440, %v442
    %v444 = vmin.f32 %v399, %v443
    %445 = vmax.xlane.f32.xlu0 %v444
    %v446 = vpop.xlane.xlu0 %445
    %vm447 = vcmp.eq.f32.partialorder %v444, %v446
    %v448 = vsel %vm447, %v54, 128
    %v449 = vand.u32 %v448, 65535
    %v450 = vshra.s32 %v448, 16
    %v451 = vcvt.s32.f32 %v449
    %v452 = vcvt.s32.f32 %v450
    %453 = vmin.xlane.f32.xlu0 %v452
    %v454 = vpop.xlane.xlu0 %453
    %vm455 = vcmp.eq.f32.partialorder %v452, %v454
    %v456 = vsel %vm455, %v451, inf
    %457 = vmin.xlane.f32.xlu0 %v456
    %v458 = vpop.xlane.xlu0 %457
    %v459 = vcvt.f32.s32 %v458
    %v460 = vcvt.f32.s32 %v454
    %v461 = vshll.u32 %v460, 16
    %v462 = vadd.s32 %v461, %v459
    %vm463 = vcmp.eq.s32.totalorder %v54, %v462
    %v464 = vsel %vm463, 1, 0
    %v465 = vcvt.s32.f32 %v464
    %v466 = vmul.f32 %v48, %v465
    %467 = vadd.xlane.f32.xlu0 %v466
    %v468 = vpop.xlane.xlu0 %467
    %v469 = vmul.f32 %v50, %v465
    %470 = vadd.xlane.f32.xlu0 %v469
    %v471 = vpop.xlane.xlu0 %470
    %v472 = vmul.f32 %v52, %v465
    %473 = vadd.xlane.f32.xlu0 %v472
    %v474 = vpop.xlane.xlu0 %473
    %vm475 = vcmp.eq.s32.totalorder %v54, 9
    %v476 = vsel %vm475, 1, 0
    %vm477 = vcmp.eq.s32.totalorder %v476, 1
    %v478 = vsel %vm477, %v468, %v433
    %v479 = vsel %vm477, %v471, %v434
    %v480 = vsel %vm477, %v474, %v435
    %v481 = vsub.f32 %v48, %v468
    %v482 = vmul.f32 %v481, %v481
    %v483 = vsub.f32 %v50, %v471
    %v484 = vmul.f32 %v483, %v483
    %v485 = vadd.f32 %v482, %v484
    %v486 = vsub.f32 %v52, %v474
    %v487 = vmul.f32 %v486, %v486
    %v488 = vadd.f32 %v485, %v487
    %v489 = vmin.f32 %v444, %v488
    %490 = vmax.xlane.f32.xlu0 %v489
    %v491 = vpop.xlane.xlu0 %490
    %vm492 = vcmp.eq.f32.partialorder %v489, %v491
    %v493 = vsel %vm492, %v54, 128
    %v494 = vand.u32 %v493, 65535
    %v495 = vshra.s32 %v493, 16
    %v496 = vcvt.s32.f32 %v494
    %v497 = vcvt.s32.f32 %v495
    %498 = vmin.xlane.f32.xlu0 %v497
    %v499 = vpop.xlane.xlu0 %498
    %vm500 = vcmp.eq.f32.partialorder %v497, %v499
    %v501 = vsel %vm500, %v496, inf
    %502 = vmin.xlane.f32.xlu0 %v501
    %v503 = vpop.xlane.xlu0 %502
    %v504 = vcvt.f32.s32 %v503
    %v505 = vcvt.f32.s32 %v499
    %v506 = vshll.u32 %v505, 16
    %v507 = vadd.s32 %v506, %v504
    %vm508 = vcmp.eq.s32.totalorder %v54, %v507
    %v509 = vsel %vm508, 1, 0
    %v510 = vcvt.s32.f32 %v509
    %v511 = vmul.f32 %v48, %v510
    %512 = vadd.xlane.f32.xlu0 %v511
    %v513 = vpop.xlane.xlu0 %512
    %v514 = vmul.f32 %v50, %v510
    %515 = vadd.xlane.f32.xlu0 %v514
    %v516 = vpop.xlane.xlu0 %515
    %v517 = vmul.f32 %v52, %v510
    %518 = vadd.xlane.f32.xlu0 %v517
    %v519 = vpop.xlane.xlu0 %518
    %vm520 = vcmp.eq.s32.totalorder %v54, 10
    %v521 = vsel %vm520, 1, 0
    %vm522 = vcmp.eq.s32.totalorder %v521, 1
    %v523 = vsel %vm522, %v513, %v478
    %v524 = vsel %vm522, %v516, %v479
    %v525 = vsel %vm522, %v519, %v480
    %v526 = vsub.f32 %v48, %v513
    %v527 = vmul.f32 %v526, %v526
    %v528 = vsub.f32 %v50, %v516
    %v529 = vmul.f32 %v528, %v528
    %v530 = vadd.f32 %v527, %v529
    %v531 = vsub.f32 %v52, %v519
    %v532 = vmul.f32 %v531, %v531
    %v533 = vadd.f32 %v530, %v532
    %v534 = vmin.f32 %v489, %v533
    %535 = vmax.xlane.f32.xlu0 %v534
    %v536 = vpop.xlane.xlu0 %535
    %vm537 = vcmp.eq.f32.partialorder %v534, %v536
    %v538 = vsel %vm537, %v54, 128
    %v539 = vand.u32 %v538, 65535
    %v540 = vshra.s32 %v538, 16
    %v541 = vcvt.s32.f32 %v539
    %v542 = vcvt.s32.f32 %v540
    %543 = vmin.xlane.f32.xlu0 %v542
    %v544 = vpop.xlane.xlu0 %543
    %vm545 = vcmp.eq.f32.partialorder %v542, %v544
    %v546 = vsel %vm545, %v541, inf
    %547 = vmin.xlane.f32.xlu0 %v546
    %v548 = vpop.xlane.xlu0 %547
    %v549 = vcvt.f32.s32 %v548
    %v550 = vcvt.f32.s32 %v544
    %v551 = vshll.u32 %v550, 16
    %v552 = vadd.s32 %v551, %v549
    %vm553 = vcmp.eq.s32.totalorder %v54, %v552
    %v554 = vsel %vm553, 1, 0
    %v555 = vcvt.s32.f32 %v554
    %v556 = vmul.f32 %v48, %v555
    %557 = vadd.xlane.f32.xlu0 %v556
    %v558 = vpop.xlane.xlu0 %557
    %v559 = vmul.f32 %v50, %v555
    %560 = vadd.xlane.f32.xlu0 %v559
    %v561 = vpop.xlane.xlu0 %560
    %v562 = vmul.f32 %v52, %v555
    %563 = vadd.xlane.f32.xlu0 %v562
    %v564 = vpop.xlane.xlu0 %563
    %vm565 = vcmp.eq.s32.totalorder %v54, 11
    %v566 = vsel %vm565, 1, 0
    %vm567 = vcmp.eq.s32.totalorder %v566, 1
    %v568 = vsel %vm567, %v558, %v523
    %v569 = vsel %vm567, %v561, %v524
    %v570 = vsel %vm567, %v564, %v525
    %v571 = vsub.f32 %v48, %v558
    %v572 = vmul.f32 %v571, %v571
    %v573 = vsub.f32 %v50, %v561
    %v574 = vmul.f32 %v573, %v573
    %v575 = vadd.f32 %v572, %v574
    %v576 = vsub.f32 %v52, %v564
    %v577 = vmul.f32 %v576, %v576
    %v578 = vadd.f32 %v575, %v577
    %v579 = vmin.f32 %v534, %v578
    %580 = vmax.xlane.f32.xlu0 %v579
    %v581 = vpop.xlane.xlu0 %580
    %vm582 = vcmp.eq.f32.partialorder %v579, %v581
    %v583 = vsel %vm582, %v54, 128
    %v584 = vand.u32 %v583, 65535
    %v585 = vshra.s32 %v583, 16
    %v586 = vcvt.s32.f32 %v584
    %v587 = vcvt.s32.f32 %v585
    %588 = vmin.xlane.f32.xlu0 %v587
    %v589 = vpop.xlane.xlu0 %588
    %vm590 = vcmp.eq.f32.partialorder %v587, %v589
    %v591 = vsel %vm590, %v586, inf
    %592 = vmin.xlane.f32.xlu0 %v591
    %v593 = vpop.xlane.xlu0 %592
    %v594 = vcvt.f32.s32 %v593
    %v595 = vcvt.f32.s32 %v589
    %v596 = vshll.u32 %v595, 16
    %v597 = vadd.s32 %v596, %v594
    %vm598 = vcmp.eq.s32.totalorder %v54, %v597
    %v599 = vsel %vm598, 1, 0
    %v600 = vcvt.s32.f32 %v599
    %v601 = vmul.f32 %v48, %v600
    %602 = vadd.xlane.f32.xlu0 %v601
    %v603 = vpop.xlane.xlu0 %602
    %v604 = vmul.f32 %v50, %v600
    %605 = vadd.xlane.f32.xlu0 %v604
    %v606 = vpop.xlane.xlu0 %605
    %v607 = vmul.f32 %v52, %v600
    %608 = vadd.xlane.f32.xlu0 %v607
    %v609 = vpop.xlane.xlu0 %608
    %vm610 = vcmp.eq.s32.totalorder %v54, 12
    %v611 = vsel %vm610, 1, 0
    %vm612 = vcmp.eq.s32.totalorder %v611, 1
    %v613 = vsel %vm612, %v603, %v568
    %v614 = vsel %vm612, %v606, %v569
    %v615 = vsel %vm612, %v609, %v570
    %v616 = vsub.f32 %v48, %v603
    %v617 = vmul.f32 %v616, %v616
    %v618 = vsub.f32 %v50, %v606
    %v619 = vmul.f32 %v618, %v618
    %v620 = vadd.f32 %v617, %v619
    %v621 = vsub.f32 %v52, %v609
    %v622 = vmul.f32 %v621, %v621
    %v623 = vadd.f32 %v620, %v622
    %v624 = vmin.f32 %v579, %v623
    %625 = vmax.xlane.f32.xlu0 %v624
    %v626 = vpop.xlane.xlu0 %625
    %vm627 = vcmp.eq.f32.partialorder %v624, %v626
    %v628 = vsel %vm627, %v54, 128
    %v629 = vand.u32 %v628, 65535
    %v630 = vshra.s32 %v628, 16
    %v631 = vcvt.s32.f32 %v629
    %v632 = vcvt.s32.f32 %v630
    %633 = vmin.xlane.f32.xlu0 %v632
    %v634 = vpop.xlane.xlu0 %633
    %vm635 = vcmp.eq.f32.partialorder %v632, %v634
    %v636 = vsel %vm635, %v631, inf
    %637 = vmin.xlane.f32.xlu0 %v636
    %v638 = vpop.xlane.xlu0 %637
    %v639 = vcvt.f32.s32 %v638
    %v640 = vcvt.f32.s32 %v634
    %v641 = vshll.u32 %v640, 16
    %v642 = vadd.s32 %v641, %v639
    %vm643 = vcmp.eq.s32.totalorder %v54, %v642
    %v644 = vsel %vm643, 1, 0
    %v645 = vcvt.s32.f32 %v644
    %v646 = vmul.f32 %v48, %v645
    %647 = vadd.xlane.f32.xlu0 %v646
    %v648 = vpop.xlane.xlu0 %647
    %v649 = vmul.f32 %v50, %v645
    %650 = vadd.xlane.f32.xlu0 %v649
    %v651 = vpop.xlane.xlu0 %650
    %v652 = vmul.f32 %v52, %v645
    %653 = vadd.xlane.f32.xlu0 %v652
    %v654 = vpop.xlane.xlu0 %653
    %vm655 = vcmp.eq.s32.totalorder %v54, 13
    %v656 = vsel %vm655, 1, 0
    %vm657 = vcmp.eq.s32.totalorder %v656, 1
    %v658 = vsel %vm657, %v648, %v613
    %v659 = vsel %vm657, %v651, %v614
    %v660 = vsel %vm657, %v654, %v615
    %v661 = vsub.f32 %v48, %v648
    %v662 = vmul.f32 %v661, %v661
    %v663 = vsub.f32 %v50, %v651
    %v664 = vmul.f32 %v663, %v663
    %v665 = vadd.f32 %v662, %v664
    %v666 = vsub.f32 %v52, %v654
    %v667 = vmul.f32 %v666, %v666
    %v668 = vadd.f32 %v665, %v667
    %v669 = vmin.f32 %v624, %v668
    %670 = vmax.xlane.f32.xlu0 %v669
    %v671 = vpop.xlane.xlu0 %670
    %vm672 = vcmp.eq.f32.partialorder %v669, %v671
    %v673 = vsel %vm672, %v54, 128
    %v674 = vand.u32 %v673, 65535
    %v675 = vshra.s32 %v673, 16
    %v676 = vcvt.s32.f32 %v674
    %v677 = vcvt.s32.f32 %v675
    %678 = vmin.xlane.f32.xlu0 %v677
    %v679 = vpop.xlane.xlu0 %678
    %vm680 = vcmp.eq.f32.partialorder %v677, %v679
    %v681 = vsel %vm680, %v676, inf
    %682 = vmin.xlane.f32.xlu0 %v681
    %v683 = vpop.xlane.xlu0 %682
    %v684 = vcvt.f32.s32 %v683
    %v685 = vcvt.f32.s32 %v679
    %v686 = vshll.u32 %v685, 16
    %v687 = vadd.s32 %v686, %v684
    %vm688 = vcmp.eq.s32.totalorder %v54, %v687
    %v689 = vsel %vm688, 1, 0
    %v690 = vcvt.s32.f32 %v689
    %v691 = vmul.f32 %v48, %v690
    %692 = vadd.xlane.f32.xlu0 %v691
    %v693 = vpop.xlane.xlu0 %692
    %v694 = vmul.f32 %v50, %v690
    %695 = vadd.xlane.f32.xlu0 %v694
    %v696 = vpop.xlane.xlu0 %695
    %v697 = vmul.f32 %v52, %v690
    %698 = vadd.xlane.f32.xlu0 %v697
    %v699 = vpop.xlane.xlu0 %698
    %vm700 = vcmp.eq.s32.totalorder %v54, 14
    %v701 = vsel %vm700, 1, 0
    %vm702 = vcmp.eq.s32.totalorder %v701, 1
    %v703 = vsel %vm702, %v693, %v658
    %v704 = vsel %vm702, %v696, %v659
    %v705 = vsel %vm702, %v699, %v660
    %v706 = vsub.f32 %v48, %v693
    %v707 = vmul.f32 %v706, %v706
    %v708 = vsub.f32 %v50, %v696
    %v709 = vmul.f32 %v708, %v708
    %v710 = vadd.f32 %v707, %v709
    %v711 = vsub.f32 %v52, %v699
    %v712 = vmul.f32 %v711, %v711
    %v713 = vadd.f32 %v710, %v712
    %v714 = vmin.f32 %v669, %v713
    %715 = vmax.xlane.f32.xlu0 %v714
    %v716 = vpop.xlane.xlu0 %715
    %vm717 = vcmp.eq.f32.partialorder %v714, %v716
    %v718 = vsel %vm717, %v54, 128
    %v719 = vand.u32 %v718, 65535
    %v720 = vshra.s32 %v718, 16
    %v721 = vcvt.s32.f32 %v719
    %v722 = vcvt.s32.f32 %v720
    %723 = vmin.xlane.f32.xlu0 %v722
    %v724 = vpop.xlane.xlu0 %723
    %vm725 = vcmp.eq.f32.partialorder %v722, %v724
    %v726 = vsel %vm725, %v721, inf
    %727 = vmin.xlane.f32.xlu0 %v726
    %v728 = vpop.xlane.xlu0 %727
    %v729 = vcvt.f32.s32 %v728
    %v730 = vcvt.f32.s32 %v724
    %v731 = vshll.u32 %v730, 16
    %v732 = vadd.s32 %v731, %v729
    %vm733 = vcmp.eq.s32.totalorder %v54, %v732
    %v734 = vsel %vm733, 1, 0
    %v735 = vcvt.s32.f32 %v734
    %v736 = vmul.f32 %v48, %v735
    %737 = vadd.xlane.f32.xlu0 %v736
    %v738 = vpop.xlane.xlu0 %737
    %v739 = vmul.f32 %v50, %v735
    %740 = vadd.xlane.f32.xlu0 %v739
    %v741 = vpop.xlane.xlu0 %740
    %v742 = vmul.f32 %v52, %v735
    %743 = vadd.xlane.f32.xlu0 %v742
    %v744 = vpop.xlane.xlu0 %743
    %vm745 = vcmp.eq.s32.totalorder %v54, 15
    %v746 = vsel %vm745, 1, 0
    %vm747 = vcmp.eq.s32.totalorder %v746, 1
    %v748 = vsel %vm747, %v738, %v703
    %v749 = vsel %vm747, %v741, %v704
    %v750 = vsel %vm747, %v744, %v705
    %vm751 = vcmask 130048
    %752 = vst.msk [vmem:[#allocation5] sm:$0xff] %vm751, %v748
    %s753 = scalar_lea.vmem [#allocation5], 8
    %754 = vst.msk [vmem:[%s753] sm:$0xff] %vm751, %v749
    %s755 = scalar_lea.vmem [#allocation5], 16
    %756 = vst.msk [vmem:[%s755] sm:$0xff] %vm751, %v750
    // Predicated region
    $region10: #{fps_sampler_forward.1} parent=1 // pred_check
      _
    $region11: #{fps_sampler_forward.1} parent=1 // pred_check_branch
      %758 = sbr.rel (0) target = $region13
    $region12: #{fps_sampler_forward.1} parent=1 // pred_region
      #allocation9 [shape = 'u32[6]{0}', space=smem, size = 0x18, scoped, tag = 'DMA stride descriptor']
      %s760 = ssub.s32 384, 96
      %761 = vsyncadd [#allocation4], %s760
      %s763 = sshll.u32 1, 14
      %s764 = sxor.u32 4294967295, %s763
      %s767 = sshll.u32 7, 18
      %s768 = sxor.u32 4294967295, %s767
      %s769 = sand.u32 0, %s768
      %s771 = sor.u32 %s769, 0
      %s773 = sshll.u32 3, 24
      %s774 = sxor.u32 4294967295, %s773
      %s775 = sand.u32 %s771, %s774
      %s777 = sor.u32 %s775, 0
      %s778 = sshll.u32 [#allocation5], 4
      %s779 = int_to_ptr.vmem [resolvable:$true] %s778
      %785 = sst [smem:[#allocation9]] 128
      %s786 = scalar_lea.smem [#allocation9], 1
      %787 = sst [smem:[%s786]] 32
      %s788 = scalar_lea.smem [#allocation9], 2
      %789 = sst [smem:[%s788]] 1
      %s790 = scalar_lea.smem [#allocation9], 3
      %791 = sst [smem:[%s790]] 32
      %s792 = scalar_lea.smem [#allocation9], 4
      %793 = sst [smem:[%s792]] 32
      %s794 = scalar_lea.smem [#allocation9], 5
      %795 = sst [smem:[%s794]] 2
      %797 = dma.general %s779, 96, %s1, [#allocation4], [#allocation8], [#allocation9], %s777, 0
    $region13: #{fps_sampler_forward.1} parent=1 // pred_fallthru
      _
    // Predicated region
    $region14: #{fps_sampler_forward.1} parent=1 // pred_check
      _
    $region15: #{fps_sampler_forward.1} parent=1 // pred_check_branch
      %799 = sbr.rel (0) target = $region17
    $region16: #{fps_sampler_forward.1} parent=1 // pred_region
      %800 = dma.done [#allocation4], 384
    $region17: #{fps_sampler_forward.1} parent=1 // pred_fallthru
      _
    %801 = vsyncpa [#allocation3], 1
    %802 = vsyncpa [#allocation4], 1

</llo_original>
